<compile_context>
chip_gen: v7x
topology: tpu7x:2x2x1
jax: 0.10.0
libtpu: 0.0.40
codegen_flags: <defaults>
</compile_context>

<pallas_src>
import numpy as np
import jax
import jax.numpy as jnp
from jax import lax
from jax.experimental import pallas as pl
from jax.experimental.pallas import tpu as pltpu

EPS = 1e-5
F32 = jnp.float32
BF16 = jnp.bfloat16


# ----------------------------- Pallas kernel --------------------------------
def make_rga_kernel(ic, isp, ds, dc, bt, hw, hwp):
    """Closure over static dims (inter_channel, inter_spatial, ds, dc, batch
    tile, valid spatial size hw, padded spatial size hwp)."""

    def kernel(x_ref,
               w_sp_proj, b_sp_proj, w_ggs, b_ggs, ws1_j, ws_vecs, b_ws2,
               w_ch_proj, b_ch_proj, w_ggc, b_ggc, wc1_j, wc_vecs, wc2_row,
               b_wc2, out_ref):
        relu = lambda v: jnp.maximum(v, 0.0)

        def mm(a, b):                                          # a @ b
            return jnp.dot(a, b, preferred_element_type=F32)

        def mmT(a, b):                                         # a @ b.T
            return lax.dot_general(a, b, (((1,), (1,)), ((), ())),
                                   preferred_element_type=F32)

        # ---- parameters: load ONCE per grid step, outside the sample loop ----
        Wsp = w_sp_proj[...]                       # (3ic, C)   bf16
        bsp = b_sp_proj[...]                       # (3ic, 1)   f32
        Wggs = w_ggs[...]                          # (2isp,HWp) bf16
        Wggs_i = Wggs[0:isp]
        Wggs_o = Wggs[isp:2 * isp]
        bggs = b_ggs[...]                          # (isp, 1)
        Ws1j = ws1_j[...]                          # (ds, isp)
        Wsv = ws_vecs[...]                         # (ds, 3): [ws1_g, b_ws1, ws2_col]
        ws1_g, b_ws1v, ws2_col = Wsv[:, 0:1], Wsv[:, 1:2], Wsv[:, 2:3]
        bws2 = b_ws2[...]                          # (1, 1)
        Wch = w_ch_proj[...]                       # (3isp,HWp) bf16
        bch = b_ch_proj[...]                       # (3isp, 1)
        Wggc = w_ggc[...]                          # (2ic, C)   bf16
        Wggc_i = Wggc[0:ic]
        Wggc_o = Wggc[ic:2 * ic]
        bggc = b_ggc[...]                          # (ic, 1)
        Wc1j = wc1_j[...]                          # (dc, ic)
        Wcv = wc_vecs[...]                         # (dc, 2): [wc1_g, b_wc1]
        wc1_g, b_wc1v = Wcv[:, 0:1], Wcv[:, 1:2]
        Wc2r = wc2_row[...]                        # (1, dc)
        bwc2 = b_wc2[...]                          # (1, 1)

        # valid-lane mask for the padded spatial dim (makes padding robust)
        if hw != hwp:
            lane = lax.broadcasted_iota(jnp.int32, (1, hwp), 1)
            valid = (lane < hw).astype(F32)
        else:
            valid = None

        def one_sample(bi, carry):
            x = x_ref[bi].astype(F32)                               # (C, HWp)
            xb = x.astype(BF16)

            # ---------------- spatial relation-aware attention ----------------
            # fused theta/phi/gx projection: one (3ic, C) @ (C, HWp) matmul
            proj = relu(mm(Wsp, xb) + bsp)                          # (3ic, HWp)
            if valid is not None:
                proj = proj * valid                                 # zero pad cols
            theta = proj[0:ic]
            phi = proj[ic:2 * ic]
            g_xs = proj[2 * ic:3 * ic]
            theta_b = theta.astype(BF16)
            phi_b = phi.astype(BF16)

            # Gram reassociation: Gs is never formed
            A_i = mmT(Wggs_i, phi_b)                                # (isp, ic)
            A_o = mmT(Wggs_o, theta_b)                              # (isp, ic)
            Gs_joint = relu(mm(A_i.astype(BF16), theta_b)
                            + mm(A_o.astype(BF16), phi_b) + bggs)   # (isp, HWp)
            g_xs_m = jnp.mean(g_xs, axis=0, keepdims=True)          # (1, HWp)
            ws1 = relu(ws1_g * g_xs_m + mm(Ws1j, Gs_joint) + b_ws1v)  # (ds, HWp)
            # final 1xds "conv" on the VPU (mul + sublane reduce), not the MXU
            W_ys = jnp.sum(ws2_col * ws1, axis=0, keepdims=True) + bws2
            x2 = jax.nn.sigmoid(W_ys) * x                           # (C, HWp)
            x2b = x2.astype(BF16)

            # ---------------- channel relation-aware attention ----------------
            # fused theta_c/phi_c/gx_c projection: (3isp, HWp) @ (HWp, C)
            projc = relu(mmT(Wch, x2b) + bch)                       # (3isp, C)
            theta_c = projc[0:isp]
            phi_c = projc[isp:2 * isp]
            g_xc = projc[2 * isp:3 * isp]
            theta_cb = theta_c.astype(BF16)
            phi_cb = phi_c.astype(BF16)

            # Gram reassociation: Gc is never formed
            A_ci = mmT(Wggc_i, phi_cb)                              # (ic, isp)
            A_co = mmT(Wggc_o, theta_cb)                            # (ic, isp)
            Gc_joint = relu(mm(A_ci.astype(BF16), theta_cb)
                            + mm(A_co.astype(BF16), phi_cb) + bggc)  # (ic, C)
            g_xc_m = jnp.mean(g_xc, axis=0, keepdims=True)          # (1, C)
            wc1 = relu(wc1_g * g_xc_m + mm(Wc1j, Gc_joint) + b_wc1v)  # (dc, C)
            # (wc2 @ wc1).T computed directly as a (C, 1) column
            W_yc_col = lax.dot_general(wc1, Wc2r, (((0,), (1,)), ((), ())),
                                       preferred_element_type=F32) + bwc2
            out_ref[bi] = (jax.nn.sigmoid(W_yc_col) * x2).astype(out_ref.dtype)
            return carry

        lax.fori_loop(0, bt, one_sample, 0, unroll=True)   # bt is capped at 4

    return kernel


# ----------------------------- host-side glue --------------------------------
def _vmem_capacity_bytes():
    try:
        return int(pltpu.get_tpu_info().vmem_capacity_bytes)
    except Exception:
        return 64 << 20          # conservative fallback (v7x per-core VMEM)


def _pick_batch_tile(b, c, hwp, itemsize, vmem_cap):
    # keep the grid >= 2 steps so ("parallel",) can use both v7x TensorCores,
    # and cap the in-kernel unroll at 4
    max_bt = max(1, min(4, b // 2 if b >= 2 else 1))
    budget = max(vmem_cap // 8, 4 << 20)          # generation-aware slab budget
    per_sample = 2 * c * hwp * itemsize           # x + out slab per sample
    bt = max(1, min(max_bt, budget // max(per_sample, 1)))
    while b % bt:
        bt -= 1
    return bt


def _vmem_limit_bytes(bt, c, hwp, ic, isp, ds, dc, kparams, io_itemsize,
                      vmem_cap):
    param_bytes = sum(int(np.prod(p.shape)) * p.dtype.itemsize for p in kparams)
    slab = bt * c * hwp * io_itemsize
    per_sample = 4 * ((3 * ic + isp + ds + 3) * hwp          # HWp-wide interm.
                      + (3 * isp + ic + dc + 1) * c)         # C-wide interm.
    est = 2 * (2 * slab) + 2 * param_bytes + 2 * bt * per_sample
    hi = int(vmem_cap * 3 // 4)                  # 48 MiB on v7x, 96 MiB on v5e/v6e
    return int(min(max(est, 32 << 20), hi))


def rga_forward(x_nchw, kparams, *, ic, isp, ds, dc, io_dtype=F32):
    b, c, h, w = x_nchw.shape
    hw = h * w
    hwp = ((hw + 127) // 128) * 128              # lane-dense spatial dim
    x = x_nchw.reshape(b, c, hw).astype(io_dtype)
    if hwp != hw:
        x = jnp.pad(x, ((0, 0), (0, 0), (0, hwp - hw)))

    vmem_cap = _vmem_capacity_bytes()
    itemsize = jnp.dtype(io_dtype).itemsize
    bt = _pick_batch_tile(b, c, hwp, itemsize, vmem_cap)
    kernel = make_rga_kernel(ic, isp, ds, dc, bt, hw, hwp)

    param_specs = [pl.BlockSpec(p.shape, lambda i: (0, 0)) for p in kparams]
    out = pl.pallas_call(
        kernel,
        out_shape=jax.ShapeDtypeStruct((b, c, hwp), io_dtype),
        grid=(b // bt,),
        in_specs=[pl.BlockSpec((bt, c, hwp), lambda i: (i, 0, 0))] + param_specs,
        out_specs=pl.BlockSpec((bt, c, hwp), lambda i: (i, 0, 0)),
        compiler_params=pltpu.CompilerParams(
            dimension_semantics=("parallel",),
            vmem_limit_bytes=_vmem_limit_bytes(bt, c, hwp, ic, isp, ds, dc,
                                               kparams, itemsize, vmem_cap)),
    )(x, *kparams)
    return out[:, :, :hw].reshape(b, c, h, w)


# ----------------------- parameter construction ------------------------------
def make_raw_params(key, c, hw, cha_ratio=8, spa_ratio=8, down_ratio=8):
    ic = c // cha_ratio
    isp = hw // spa_ratio
    ds = (1 + isp) // down_ratio
    dc = (1 + ic) // down_ratio
    assert ds >= 1 and dc >= 1, "pick c, h*w large enough for down_ratio"
    defs = {
        "theta_s": (ic, c), "phi_s": (ic, c), "gg_s": (isp, 2 * hw),
        "gx_s": (ic, c), "ws1": (ds, 1 + isp), "ws2": (1, ds),
        "theta_c": (isp, hw), "phi_c": (isp, hw), "gg_c": (ic, 2 * c),
        "gx_c": (isp, hw), "wc1": (dc, 1 + ic), "wc2": (1, dc),
    }
    raw = {}
    for name, shape in defs.items():
        key, kw, kg, kb, km, kv = jax.random.split(key, 6)
        oc = shape[0]
        raw[name + "_w"] = 0.1 * jax.random.normal(kw, shape, F32)
        raw[name + "_g"] = 1.0 + 0.1 * jax.random.normal(kg, (oc,), F32)
        raw[name + "_beta"] = 0.1 * jax.random.normal(kb, (oc,), F32)
        raw[name + "_m"] = 0.1 * jax.random.normal(km, (oc,), F32)
        raw[name + "_v"] = 1.0 + 0.1 * jax.random.uniform(kv, (oc,), F32)
    return raw, (ic, isp, ds, dc)


def fold_conv_bn(name, raw):
    scale = raw[name + "_g"] / jnp.sqrt(raw[name + "_v"] + EPS)
    w = raw[name + "_w"] * scale[:, None]
    b = raw[name + "_beta"] - raw[name + "_m"] * scale     # (oc,)
    return w, b


def make_kernel_params(raw, c, hw, hwp):
    def col(vec):                                          # bias as (oc, 1)
        return vec[:, None].astype(F32)

    def pad_cols(wm, n_to):                                # zero-pad HW columns
        return jnp.pad(wm, ((0, 0), (0, n_to - wm.shape[1])))

    th_s_w, th_s_b = fold_conv_bn("theta_s", raw)
    ph_s_w, ph_s_b = fold_conv_bn("phi_s", raw)
    gx_s_w, gx_s_b = fold_conv_bn("gx_s", raw)
    gg_s_w, gg_s_b = fold_conv_bn("gg_s", raw)
    ws1_w, ws1_b = fold_conv_bn("ws1", raw)
    ws2_w, ws2_b = fold_conv_bn("ws2", raw)
    th_c_w, th_c_b = fold_conv_bn("theta_c", raw)
    ph_c_w, ph_c_b = fold_conv_bn("phi_c", raw)
    gx_c_w, gx_c_b = fold_conv_bn("gx_c", raw)
    gg_c_w, gg_c_b = fold_conv_bn("gg_c", raw)
    wc1_w, wc1_b = fold_conv_bn("wc1", raw)
    wc2_w, wc2_b = fold_conv_bn("wc2", raw)

    # ----- spatial branch -----
    w_sp_proj = jnp.concatenate([th_s_w, ph_s_w, gx_s_w], axis=0).astype(BF16)  # (3ic, C)
    b_sp_proj = col(jnp.concatenate([th_s_b, ph_s_b, gx_s_b]))                  # (3ic, 1)
    w_ggs = pad_cols(jnp.concatenate([gg_s_w[:, :hw],          # acts on Gs.T
                                      gg_s_w[:, hw:]], axis=0),  # acts on Gs
                     hwp).astype(BF16)                                          # (2isp, HWp)
    b_ggs = col(gg_s_b)                                                         # (isp, 1)
    ws1_j = ws1_w[:, 1:].astype(F32)                                            # (ds, isp)
    ws_vecs = jnp.stack([ws1_w[:, 0], ws1_b, ws2_w[0]], axis=1).astype(F32)     # (ds, 3)
    b_ws2 = ws2_b.reshape(1, 1).astype(F32)                                     # (1, 1)
    # ----- channel branch -----
    w_ch_proj = pad_cols(jnp.concatenate([th_c_w, ph_c_w, gx_c_w], axis=0),
                         hwp).astype(BF16)                                      # (3isp, HWp)
    b_ch_proj = col(jnp.concatenate([th_c_b, ph_c_b, gx_c_b]))                  # (3isp, 1)
    w_ggc = jnp.concatenate([gg_c_w[:, :c],                    # acts on Gc.T
                             gg_c_w[:, c:]], axis=0).astype(BF16)               # (2ic, C)
    b_ggc = col(gg_c_b)                                                         # (ic, 1)
    wc1_j = wc1_w[:, 1:].astype(F32)                                            # (dc, ic)
    wc_vecs = jnp.stack([wc1_w[:, 0], wc1_b], axis=1).astype(F32)               # (dc, 2)
    wc2_row = wc2_w.astype(F32)                                                 # (1, dc)
    b_wc2 = wc2_b.reshape(1, 1).astype(F32)                                     # (1, 1)

    return [w_sp_proj, b_sp_proj, w_ggs, b_ggs, ws1_j, ws_vecs, b_ws2,
            w_ch_proj, b_ch_proj, w_ggc, b_ggc, wc1_j, wc_vecs, wc2_row, b_wc2]


# -------------------------- pure-JAX reference -------------------------------
def ref_forward(x_nchw, raw):
    b, c, h, w = x_nchw.shape
    hw = h * w

    def bn(y, name):  # y: (b, oc, n)
        g = raw[name + "_g"][None, :, None]
        be = raw[name + "_beta"][None, :, None]
        m = raw[name + "_m"][None, :, None]
        v = raw[name + "_v"][None, :, None]
        return (y - m) / jnp.sqrt(v + EPS) * g + be

    def conv(name, inp):  # (b, cin, n) -> (b, oc, n)
        return jnp.einsum("oc,bcn->bon", raw[name + "_w"], inp)

    def cbr(name, inp):
        return jax.nn.relu(bn(conv(name, inp), name))

    x = x_nchw.reshape(b, c, hw)
    # spatial branch
    theta = cbr("theta_s", x)
    phi = cbr("phi_s", x)
    Gs = jnp.einsum("bkn,bkm->bnm", theta, phi)          # (b, hw, hw)
    Gs_joint = jnp.concatenate([jnp.transpose(Gs, (0, 2, 1)), Gs], axis=1)
    Gs_joint = cbr("gg_s", Gs_joint)
    g_xs = jnp.mean(cbr("gx_s", x), axis=1, keepdims=True)
    ys = jnp.concatenate([g_xs, Gs_joint], axis=1)
    W_ys = bn(conv("ws2", cbr("ws1", ys)), "ws2")        # (b, 1, hw)
    x = jax.nn.sigmoid(W_ys) * x
    # channel branch
    xc = jnp.transpose(x, (0, 2, 1))                     # (b, hw, c)
    theta_c = jnp.transpose(cbr("theta_c", xc), (0, 2, 1))  # (b, c, is)
    phi_c = cbr("phi_c", xc)                             # (b, is, c)
    Gc = jnp.einsum("bci,bik->bck", theta_c, phi_c)      # (b, c, c)
    Gc_joint = jnp.concatenate([jnp.transpose(Gc, (0, 2, 1)), Gc], axis=1)
    Gc_joint = cbr("gg_c", Gc_joint)
    g_xc = jnp.mean(cbr("gx_c", xc), axis=1, keepdims=True)
    yc = jnp.concatenate([g_xc, Gc_joint], axis=1)
    W_yc = bn(conv("wc2", cbr("wc1", yc)), "wc2")        # (b, 1, c)
    W_yc = jnp.transpose(W_yc, (0, 2, 1))                # (b, c, 1)
    out = jax.nn.sigmoid(W_yc) * x
    return out.reshape(b, c, h, w)


if __name__ == "__main__":
    B, C, H, W = 2, 64, 8, 8      # in_channel=64, in_spatial=64
    key = jax.random.PRNGKey(0)
    kx, kp = jax.random.split(key)
    x = jax.random.normal(kx, (B, C, H, W), F32)

    HW = H * W
    HWP = ((HW + 127) // 128) * 128
    raw, (ic, isp, ds, dc) = make_raw_params(kp, C, HW)
    kparams = make_kernel_params(raw, C, HW, HWP)

    out = rga_forward(x, kparams, ic=ic, isp=isp, ds=ds, dc=dc)
    out = jax.block_until_ready(out)

    ref = ref_forward(x, raw)
    np.testing.assert_allclose(np.asarray(out), np.asarray(ref),
                               atol=3e-2, rtol=3e-2)
    print("KERNEL_OK")
</pallas_src>

<mosaic_0001>
module attributes {stable_mosaic.version = 11 : i64} {
  func.func @kernel(%arg0: i32, %arg1: memref<1x64x128xf32, #tpu.memory_space<vmem>>, %arg2: memref<24x64xbf16, #tpu.memory_space<vmem>>, %arg3: memref<24x1xf32, #tpu.memory_space<vmem>>, %arg4: memref<16x128xbf16, #tpu.memory_space<vmem>>, %arg5: memref<8x1xf32, #tpu.memory_space<vmem>>, %arg6: memref<1x8xf32, #tpu.memory_space<vmem>>, %arg7: memref<1x3xf32, #tpu.memory_space<vmem>>, %arg8: memref<1x1xf32, #tpu.memory_space<vmem>>, %arg9: memref<24x128xbf16, #tpu.memory_space<vmem>>, %arg10: memref<24x1xf32, #tpu.memory_space<vmem>>, %arg11: memref<16x64xbf16, #tpu.memory_space<vmem>>, %arg12: memref<8x1xf32, #tpu.memory_space<vmem>>, %arg13: memref<1x8xf32, #tpu.memory_space<vmem>>, %arg14: memref<1x2xf32, #tpu.memory_space<vmem>>, %arg15: memref<1x1xf32, #tpu.memory_space<vmem>>, %arg16: memref<1x1xf32, #tpu.memory_space<vmem>>, %arg17: memref<1x64x128xf32, #tpu.memory_space<vmem>>) attributes {dimension_semantics = [#tpu.dimension_semantics<parallel>], iteration_bounds = array<i64: 2>, scalar_prefetch = 0 : i64, scratch_operands = 0 : i64, tpu.core_type = #tpu.core_type<tc>, window_params = [{transform_indices = @transform_0, window_bounds = array<i64: 1, 64, 128>}, {pipeline_mode = #tpu.pipeline_mode<synchronous>, transform_indices = @transform_1, window_bounds = array<i64: 24, 64>}, {pipeline_mode = #tpu.pipeline_mode<synchronous>, transform_indices = @transform_2, window_bounds = array<i64: 24, 1>}, {pipeline_mode = #tpu.pipeline_mode<synchronous>, transform_indices = @transform_3, window_bounds = array<i64: 16, 128>}, {pipeline_mode = #tpu.pipeline_mode<synchronous>, transform_indices = @transform_4, window_bounds = array<i64: 8, 1>}, {pipeline_mode = #tpu.pipeline_mode<synchronous>, transform_indices = @transform_5, window_bounds = array<i64: 1, 8>}, {pipeline_mode = #tpu.pipeline_mode<synchronous>, transform_indices = @transform_6, window_bounds = array<i64: 1, 3>}, {pipeline_mode = #tpu.pipeline_mode<synchronous>, transform_indices = @transform_7, window_bounds = array<i64: 1, 1>}, {pipeline_mode = #tpu.pipeline_mode<synchronous>, transform_indices = @transform_8, window_bounds = array<i64: 24, 128>}, {pipeline_mode = #tpu.pipeline_mode<synchronous>, transform_indices = @transform_9, window_bounds = array<i64: 24, 1>}, {pipeline_mode = #tpu.pipeline_mode<synchronous>, transform_indices = @transform_10, window_bounds = array<i64: 16, 64>}, {pipeline_mode = #tpu.pipeline_mode<synchronous>, transform_indices = @transform_11, window_bounds = array<i64: 8, 1>}, {pipeline_mode = #tpu.pipeline_mode<synchronous>, transform_indices = @transform_12, window_bounds = array<i64: 1, 8>}, {pipeline_mode = #tpu.pipeline_mode<synchronous>, transform_indices = @transform_13, window_bounds = array<i64: 1, 2>}, {pipeline_mode = #tpu.pipeline_mode<synchronous>, transform_indices = @transform_14, window_bounds = array<i64: 1, 1>}, {pipeline_mode = #tpu.pipeline_mode<synchronous>, transform_indices = @transform_15, window_bounds = array<i64: 1, 1>}, {transform_indices = @transform_16, window_bounds = array<i64: 1, 64, 128>}]} {
    %c0 = arith.constant 0 : index
    %c0_0 = arith.constant 0 : index
    %0 = vector.load %arg2[%c0, %c0_0] : memref<24x64xbf16, #tpu.memory_space<vmem>>, vector<24x64xbf16>
    %c0_1 = arith.constant 0 : index
    %c0_2 = arith.constant 0 : index
    %1 = vector.load %arg3[%c0_1, %c0_2] : memref<24x1xf32, #tpu.memory_space<vmem>>, vector<24x1xf32>
    %c0_3 = arith.constant 0 : index
    %c0_4 = arith.constant 0 : index
    %2 = vector.load %arg4[%c0_3, %c0_4] : memref<16x128xbf16, #tpu.memory_space<vmem>>, vector<16x128xbf16>
    %3 = vector.extract_strided_slice %2 {offsets = [0, 0], sizes = [8, 128], strides = [1, 1]} : vector<16x128xbf16> to vector<8x128xbf16>
    %4 = vector.extract_strided_slice %2 {offsets = [8, 0], sizes = [8, 128], strides = [1, 1]} : vector<16x128xbf16> to vector<8x128xbf16>
    %c0_5 = arith.constant 0 : index
    %c0_6 = arith.constant 0 : index
    %5 = vector.load %arg5[%c0_5, %c0_6] : memref<8x1xf32, #tpu.memory_space<vmem>>, vector<8x1xf32>
    %c0_7 = arith.constant 0 : index
    %c0_8 = arith.constant 0 : index
    %6 = vector.load %arg6[%c0_7, %c0_8] : memref<1x8xf32, #tpu.memory_space<vmem>>, vector<1x8xf32>
    %c0_9 = arith.constant 0 : index
    %c0_10 = arith.constant 0 : index
    %7 = vector.load %arg7[%c0_9, %c0_10] : memref<1x3xf32, #tpu.memory_space<vmem>>, vector<1x3xf32>
    %8 = vector.extract_strided_slice %7 {offsets = [0, 0], sizes = [1, 1], strides = [1, 1]} : vector<1x3xf32> to vector<1x1xf32>
    %9 = vector.extract_strided_slice %7 {offsets = [0, 1], sizes = [1, 1], strides = [1, 1]} : vector<1x3xf32> to vector<1x1xf32>
    %10 = vector.extract_strided_slice %7 {offsets = [0, 2], sizes = [1, 1], strides = [1, 1]} : vector<1x3xf32> to vector<1x1xf32>
    %c0_11 = arith.constant 0 : index
    %c0_12 = arith.constant 0 : index
    %11 = vector.load %arg8[%c0_11, %c0_12] : memref<1x1xf32, #tpu.memory_space<vmem>>, vector<1x1xf32>
    %c0_13 = arith.constant 0 : index
    %c0_14 = arith.constant 0 : index
    %12 = vector.load %arg9[%c0_13, %c0_14] : memref<24x128xbf16, #tpu.memory_space<vmem>>, vector<24x128xbf16>
    %c0_15 = arith.constant 0 : index
    %c0_16 = arith.constant 0 : index
    %13 = vector.load %arg10[%c0_15, %c0_16] : memref<24x1xf32, #tpu.memory_space<vmem>>, vector<24x1xf32>
    %c0_17 = arith.constant 0 : index
    %c0_18 = arith.constant 0 : index
    %14 = vector.load %arg11[%c0_17, %c0_18] : memref<16x64xbf16, #tpu.memory_space<vmem>>, vector<16x64xbf16>
    %15 = vector.extract_strided_slice %14 {offsets = [0, 0], sizes = [8, 64], strides = [1, 1]} : vector<16x64xbf16> to vector<8x64xbf16>
    %16 = vector.extract_strided_slice %14 {offsets = [8, 0], sizes = [8, 64], strides = [1, 1]} : vector<16x64xbf16> to vector<8x64xbf16>
    %c0_19 = arith.constant 0 : index
    %c0_20 = arith.constant 0 : index
    %17 = vector.load %arg12[%c0_19, %c0_20] : memref<8x1xf32, #tpu.memory_space<vmem>>, vector<8x1xf32>
    %c0_21 = arith.constant 0 : index
    %c0_22 = arith.constant 0 : index
    %18 = vector.load %arg13[%c0_21, %c0_22] : memref<1x8xf32, #tpu.memory_space<vmem>>, vector<1x8xf32>
    %c0_23 = arith.constant 0 : index
    %c0_24 = arith.constant 0 : index
    %19 = vector.load %arg14[%c0_23, %c0_24] : memref<1x2xf32, #tpu.memory_space<vmem>>, vector<1x2xf32>
    %20 = vector.extract_strided_slice %19 {offsets = [0, 0], sizes = [1, 1], strides = [1, 1]} : vector<1x2xf32> to vector<1x1xf32>
    %21 = vector.extract_strided_slice %19 {offsets = [0, 1], sizes = [1, 1], strides = [1, 1]} : vector<1x2xf32> to vector<1x1xf32>
    %c0_25 = arith.constant 0 : index
    %c0_26 = arith.constant 0 : index
    %22 = vector.load %arg15[%c0_25, %c0_26] : memref<1x1xf32, #tpu.memory_space<vmem>>, vector<1x1xf32>
    %c0_27 = arith.constant 0 : index
    %c0_28 = arith.constant 0 : index
    %23 = vector.load %arg16[%c0_27, %c0_28] : memref<1x1xf32, #tpu.memory_space<vmem>>, vector<1x1xf32>
    %24 = tpu.iota {dimensions = array<i32: 1>} : vector<1x128xi32>
    %c64_i32 = arith.constant 64 : i32
    %25 = vector.broadcast %c64_i32 : i32 to vector<1x128xi32>
    %26 = arith.cmpi slt, %24, %25 : vector<1x128xi32>
    %27 = arith.extui %26 : vector<1x128xi1> to vector<1x128xi32>
    %28 = arith.sitofp %27 : vector<1x128xi32> to vector<1x128xf32>
    %c0_i32 = arith.constant 0 : i32
    %29 = arith.index_cast %c0_i32 : i32 to index
    %c0_29 = arith.constant 0 : index
    %c0_30 = arith.constant 0 : index
    %30 = vector.load %arg1[%29, %c0_29, %c0_30] : memref<1x64x128xf32, #tpu.memory_space<vmem>>, vector<1x64x128xf32>
    %31 = vector.shape_cast %30 : vector<1x64x128xf32> to vector<64x128xf32>
    %32 = arith.truncf %31 : vector<64x128xf32> to vector<64x128xbf16>
    %cst = arith.constant dense<0.000000e+00> : vector<24x128xf32>
    %33 = tpu.matmul %0, %32, %cst {dimension_numbers = #tpu.dot_dimension_numbers<[1], [0], [0], [1], [0, 0, 1, 1], [], []>} : vector<24x64xbf16>, vector<64x128xbf16>, vector<24x128xf32> -> vector<24x128xf32>
    %34 = vector.broadcast %1 : vector<24x1xf32> to vector<24x128xf32>
    %35 = arith.addf %33, %34 : vector<24x128xf32>
    %cst_31 = arith.constant 0.000000e+00 : f32
    %36 = vector.broadcast %cst_31 : f32 to vector<24x128xf32>
    %37 = arith.maximumf %35, %36 : vector<24x128xf32>
    %38 = vector.broadcast %28 : vector<1x128xf32> to vector<24x128xf32>
    %39 = arith.mulf %37, %38 : vector<24x128xf32>
    %40 = vector.extract_strided_slice %39 {offsets = [0, 0], sizes = [8, 128], strides = [1, 1]} : vector<24x128xf32> to vector<8x128xf32>
    %41 = vector.extract_strided_slice %39 {offsets = [8, 0], sizes = [8, 128], strides = [1, 1]} : vector<24x128xf32> to vector<8x128xf32>
    %42 = vector.extract_strided_slice %39 {offsets = [16, 0], sizes = [8, 128], strides = [1, 1]} : vector<24x128xf32> to vector<8x128xf32>
    %43 = arith.truncf %40 : vector<8x128xf32> to vector<8x128xbf16>
    %44 = arith.truncf %41 : vector<8x128xf32> to vector<8x128xbf16>
    %cst_32 = arith.constant dense<0.000000e+00> : vector<8x8xf32>
    %45 = tpu.matmul %3, %44, %cst_32 {dimension_numbers = #tpu.dot_dimension_numbers<[1], [1], [0], [0], [0, 0, 1, 0], [], []>} : vector<8x128xbf16>, vector<8x128xbf16>, vector<8x8xf32> -> vector<8x8xf32>
    %cst_33 = arith.constant dense<0.000000e+00> : vector<8x8xf32>
    %46 = tpu.matmul %4, %43, %cst_33 {dimension_numbers = #tpu.dot_dimension_numbers<[1], [1], [0], [0], [0, 0, 1, 0], [], []>} : vector<8x128xbf16>, vector<8x128xbf16>, vector<8x8xf32> -> vector<8x8xf32>
    %47 = arith.truncf %45 : vector<8x8xf32> to vector<8x8xbf16>
    %cst_34 = arith.constant dense<0.000000e+00> : vector<8x128xf32>
    %48 = tpu.matmul %47, %43, %cst_34 {dimension_numbers = #tpu.dot_dimension_numbers<[1], [0], [0], [1], [0, 0, 1, 1], [], []>} : vector<8x8xbf16>, vector<8x128xbf16>, vector<8x128xf32> -> vector<8x128xf32>
    %49 = arith.truncf %46 : vector<8x8xf32> to vector<8x8xbf16>
    %cst_35 = arith.constant dense<0.000000e+00> : vector<8x128xf32>
    %50 = tpu.matmul %49, %44, %cst_35 {dimension_numbers = #tpu.dot_dimension_numbers<[1], [0], [0], [1], [0, 0, 1, 1], [], []>} : vector<8x8xbf16>, vector<8x128xbf16>, vector<8x128xf32> -> vector<8x128xf32>
    %51 = arith.addf %48, %50 : vector<8x128xf32>
    %52 = vector.broadcast %5 : vector<8x1xf32> to vector<8x128xf32>
    %53 = arith.addf %51, %52 : vector<8x128xf32>
    %cst_36 = arith.constant 0.000000e+00 : f32
    %54 = vector.broadcast %cst_36 : f32 to vector<8x128xf32>
    %55 = arith.maximumf %53, %54 : vector<8x128xf32>
    %cst_37 = arith.constant dense<0.000000e+00> : vector<128xf32>
    %56 = vector.multi_reduction <add>, %42, %cst_37 [0] : vector<8x128xf32> to vector<128xf32>
    %57 = vector.shape_cast %56 : vector<128xf32> to vector<1x128xf32>
    %cst_38 = arith.constant 8.000000e+00 : f32
    %58 = vector.broadcast %cst_38 : f32 to vector<1x128xf32>
    %59 = arith.divf %57, %58 : vector<1x128xf32>
    %60 = vector.broadcast %8 : vector<1x1xf32> to vector<1x128xf32>
    %61 = arith.mulf %60, %59 : vector<1x128xf32>
    %cst_39 = arith.constant dense<0.000000e+00> : vector<1x128xf32>
    %62 = tpu.matmul %6, %55, %cst_39 {dimension_numbers = #tpu.dot_dimension_numbers<[1], [0], [0], [1], [0, 0, 1, 1], [], []>} : vector<1x8xf32>, vector<8x128xf32>, vector<1x128xf32> -> vector<1x128xf32>
    %63 = arith.addf %61, %62 : vector<1x128xf32>
    %64 = vector.broadcast %9 : vector<1x1xf32> to vector<1x128xf32>
    %65 = arith.addf %63, %64 : vector<1x128xf32>
    %cst_40 = arith.constant 0.000000e+00 : f32
    %66 = vector.broadcast %cst_40 : f32 to vector<1x128xf32>
    %67 = arith.maximumf %65, %66 : vector<1x128xf32>
    %68 = vector.broadcast %10 : vector<1x1xf32> to vector<1x128xf32>
    %69 = arith.mulf %68, %67 : vector<1x128xf32>
    %cst_41 = arith.constant dense<0.000000e+00> : vector<128xf32>
    %70 = vector.multi_reduction <add>, %69, %cst_41 [0] : vector<1x128xf32> to vector<128xf32>
    %71 = vector.shape_cast %70 : vector<128xf32> to vector<1x128xf32>
    %72 = vector.broadcast %11 : vector<1x1xf32> to vector<1x128xf32>
    %73 = arith.addf %71, %72 : vector<1x128xf32>
    %74 = arith.negf %73 : vector<1x128xf32>
    %75 = math.exp %74 : vector<1x128xf32>
    %cst_42 = arith.constant 1.000000e+00 : f32
    %76 = vector.broadcast %cst_42 : f32 to vector<1x128xf32>
    %77 = arith.addf %76, %75 : vector<1x128xf32>
    %78 = arith.divf %76, %77 : vector<1x128xf32>
    %79 = vector.broadcast %78 : vector<1x128xf32> to vector<64x128xf32>
    %80 = arith.mulf %79, %31 : vector<64x128xf32>
    %81 = arith.truncf %80 : vector<64x128xf32> to vector<64x128xbf16>
    %cst_43 = arith.constant dense<0.000000e+00> : vector<24x64xf32>
    %82 = tpu.matmul %12, %81, %cst_43 {dimension_numbers = #tpu.dot_dimension_numbers<[1], [1], [0], [0], [0, 0, 1, 0], [], []>} : vector<24x128xbf16>, vector<64x128xbf16>, vector<24x64xf32> -> vector<24x64xf32>
    %83 = vector.broadcast %13 : vector<24x1xf32> to vector<24x64xf32>
    %84 = arith.addf %82, %83 : vector<24x64xf32>
    %cst_44 = arith.constant 0.000000e+00 : f32
    %85 = vector.broadcast %cst_44 : f32 to vector<24x64xf32>
    %86 = arith.maximumf %84, %85 : vector<24x64xf32>
    %87 = vector.extract_strided_slice %86 {offsets = [0, 0], sizes = [8, 64], strides = [1, 1]} : vector<24x64xf32> to vector<8x64xf32>
    %88 = vector.extract_strided_slice %86 {offsets = [8, 0], sizes = [8, 64], strides = [1, 1]} : vector<24x64xf32> to vector<8x64xf32>
    %89 = vector.extract_strided_slice %86 {offsets = [16, 0], sizes = [8, 64], strides = [1, 1]} : vector<24x64xf32> to vector<8x64xf32>
    %90 = arith.truncf %87 : vector<8x64xf32> to vector<8x64xbf16>
    %91 = arith.truncf %88 : vector<8x64xf32> to vector<8x64xbf16>
    %cst_45 = arith.constant dense<0.000000e+00> : vector<8x8xf32>
    %92 = tpu.matmul %15, %91, %cst_45 {dimension_numbers = #tpu.dot_dimension_numbers<[1], [1], [0], [0], [0, 0, 1, 0], [], []>} : vector<8x64xbf16>, vector<8x64xbf16>, vector<8x8xf32> -> vector<8x8xf32>
    %cst_46 = arith.constant dense<0.000000e+00> : vector<8x8xf32>
    %93 = tpu.matmul %16, %90, %cst_46 {dimension_numbers = #tpu.dot_dimension_numbers<[1], [1], [0], [0], [0, 0, 1, 0], [], []>} : vector<8x64xbf16>, vector<8x64xbf16>, vector<8x8xf32> -> vector<8x8xf32>
    %94 = arith.truncf %92 : vector<8x8xf32> to vector<8x8xbf16>
    %cst_47 = arith.constant dense<0.000000e+00> : vector<8x64xf32>
    %95 = tpu.matmul %94, %90, %cst_47 {dimension_numbers = #tpu.dot_dimension_numbers<[1], [0], [0], [1], [0, 0, 1, 1], [], []>} : vector<8x8xbf16>, vector<8x64xbf16>, vector<8x64xf32> -> vector<8x64xf32>
    %96 = arith.truncf %93 : vector<8x8xf32> to vector<8x8xbf16>
    %cst_48 = arith.constant dense<0.000000e+00> : vector<8x64xf32>
    %97 = tpu.matmul %96, %91, %cst_48 {dimension_numbers = #tpu.dot_dimension_numbers<[1], [0], [0], [1], [0, 0, 1, 1], [], []>} : vector<8x8xbf16>, vector<8x64xbf16>, vector<8x64xf32> -> vector<8x64xf32>
    %98 = arith.addf %95, %97 : vector<8x64xf32>
    %99 = vector.broadcast %17 : vector<8x1xf32> to vector<8x64xf32>
    %100 = arith.addf %98, %99 : vector<8x64xf32>
    %cst_49 = arith.constant 0.000000e+00 : f32
    %101 = vector.broadcast %cst_49 : f32 to vector<8x64xf32>
    %102 = arith.maximumf %100, %101 : vector<8x64xf32>
    %cst_50 = arith.constant dense<0.000000e+00> : vector<64xf32>
    %103 = vector.multi_reduction <add>, %89, %cst_50 [0] : vector<8x64xf32> to vector<64xf32>
    %104 = vector.shape_cast %103 : vector<64xf32> to vector<1x64xf32>
    %cst_51 = arith.constant 8.000000e+00 : f32
    %105 = vector.broadcast %cst_51 : f32 to vector<1x64xf32>
    %106 = arith.divf %104, %105 : vector<1x64xf32>
    %107 = vector.broadcast %20 : vector<1x1xf32> to vector<1x64xf32>
    %108 = arith.mulf %107, %106 : vector<1x64xf32>
    %cst_52 = arith.constant dense<0.000000e+00> : vector<1x64xf32>
    %109 = tpu.matmul %18, %102, %cst_52 {dimension_numbers = #tpu.dot_dimension_numbers<[1], [0], [0], [1], [0, 0, 1, 1], [], []>} : vector<1x8xf32>, vector<8x64xf32>, vector<1x64xf32> -> vector<1x64xf32>
    %110 = arith.addf %108, %109 : vector<1x64xf32>
    %111 = vector.broadcast %21 : vector<1x1xf32> to vector<1x64xf32>
    %112 = arith.addf %110, %111 : vector<1x64xf32>
    %cst_53 = arith.constant 0.000000e+00 : f32
    %113 = vector.broadcast %cst_53 : f32 to vector<1x64xf32>
    %114 = arith.maximumf %112, %113 : vector<1x64xf32>
    %cst_54 = arith.constant dense<0.000000e+00> : vector<64x1xf32>
    %115 = tpu.matmul %114, %22, %cst_54 {dimension_numbers = #tpu.dot_dimension_numbers<[0], [1], [1], [0], [0, 1, 1, 0], [], []>} : vector<1x64xf32>, vector<1x1xf32>, vector<64x1xf32> -> vector<64x1xf32>
    %116 = vector.broadcast %23 : vector<1x1xf32> to vector<64x1xf32>
    %117 = arith.addf %115, %116 : vector<64x1xf32>
    %118 = arith.negf %117 : vector<64x1xf32>
    %119 = math.exp %118 : vector<64x1xf32>
    %cst_55 = arith.constant 1.000000e+00 : f32
    %120 = vector.broadcast %cst_55 : f32 to vector<64x1xf32>
    %121 = arith.addf %120, %119 : vector<64x1xf32>
    %122 = arith.divf %120, %121 : vector<64x1xf32>
    %123 = vector.broadcast %122 : vector<64x1xf32> to vector<64x128xf32>
    %124 = arith.mulf %123, %80 : vector<64x128xf32>
    %125 = arith.index_cast %c0_i32 : i32 to index
    %c0_56 = arith.constant 0 : index
    %c0_57 = arith.constant 0 : index
    %126 = vector.load %arg17[%125, %c0_56, %c0_57] : memref<1x64x128xf32, #tpu.memory_space<vmem>>, vector<1x64x128xf32>
    %127 = vector.shape_cast %126 : vector<1x64x128xf32> to vector<64x128xf32>
    %128 = vector.shape_cast %124 : vector<64x128xf32> to vector<1x64x128xf32>
    tpu.vector_store %arg17[%125, %c0_56, %c0_57], %128 {strides = array<i32>} : memref<1x64x128xf32, #tpu.memory_space<vmem>>, vector<1x64x128xf32>,
    %c1_i32 = arith.constant 1 : i32
    return
  }
  func.func @transform_0(%arg0: i32) -> (i32, i32, i32) {
    %c0_i32 = arith.constant 0 : i32
    %c0_i32_0 = arith.constant 0 : i32
    %c0_i32_1 = arith.constant 0 : i32
    return %arg0, %c0_i32, %c0_i32_0 : i32, i32, i32
  }
  func.func @transform_1(%arg0: i32) -> (i32, i32) {
    %c0_i32 = arith.constant 0 : i32
    %c0_i32_0 = arith.constant 0 : i32
    %c0_i32_1 = arith.constant 0 : i32
    return %c0_i32, %c0_i32_0 : i32, i32
  }
  func.func @transform_2(%arg0: i32) -> (i32, i32) {
    %c0_i32 = arith.constant 0 : i32
    %c0_i32_0 = arith.constant 0 : i32
    %c0_i32_1 = arith.constant 0 : i32
    return %c0_i32, %c0_i32_0 : i32, i32
  }
  func.func @transform_3(%arg0: i32) -> (i32, i32) {
    %c0_i32 = arith.constant 0 : i32
    %c0_i32_0 = arith.constant 0 : i32
    %c0_i32_1 = arith.constant 0 : i32
    return %c0_i32, %c0_i32_0 : i32, i32
  }
  func.func @transform_4(%arg0: i32) -> (i32, i32) {
    %c0_i32 = arith.constant 0 : i32
    %c0_i32_0 = arith.constant 0 : i32
    %c0_i32_1 = arith.constant 0 : i32
    return %c0_i32, %c0_i32_0 : i32, i32
  }
  func.func @transform_5(%arg0: i32) -> (i32, i32) {
    %c0_i32 = arith.constant 0 : i32
    %c0_i32_0 = arith.constant 0 : i32
    %c0_i32_1 = arith.constant 0 : i32
    return %c0_i32, %c0_i32_0 : i32, i32
  }
  func.func @transform_6(%arg0: i32) -> (i32, i32) {
    %c0_i32 = arith.constant 0 : i32
    %c0_i32_0 = arith.constant 0 : i32
    %c0_i32_1 = arith.constant 0 : i32
    return %c0_i32, %c0_i32_0 : i32, i32
  }
  func.func @transform_7(%arg0: i32) -> (i32, i32) {
    %c0_i32 = arith.constant 0 : i32
    %c0_i32_0 = arith.constant 0 : i32
    %c0_i32_1 = arith.constant 0 : i32
    return %c0_i32, %c0_i32_0 : i32, i32
  }
  func.func @transform_8(%arg0: i32) -> (i32, i32) {
    %c0_i32 = arith.constant 0 : i32
    %c0_i32_0 = arith.constant 0 : i32
    %c0_i32_1 = arith.constant 0 : i32
    return %c0_i32, %c0_i32_0 : i32, i32
  }
  func.func @transform_9(%arg0: i32) -> (i32, i32) {
    %c0_i32 = arith.constant 0 : i32
    %c0_i32_0 = arith.constant 0 : i32
    %c0_i32_1 = arith.constant 0 : i32
    return %c0_i32, %c0_i32_0 : i32, i32
  }
  func.func @transform_10(%arg0: i32) -> (i32, i32) {
    %c0_i32 = arith.constant 0 : i32
    %c0_i32_0 = arith.constant 0 : i32
    %c0_i32_1 = arith.constant 0 : i32
    return %c0_i32, %c0_i32_0 : i32, i32
  }
  func.func @transform_11(%arg0: i32) -> (i32, i32) {
    %c0_i32 = arith.constant 0 : i32
    %c0_i32_0 = arith.constant 0 : i32
    %c0_i32_1 = arith.constant 0 : i32
    return %c0_i32, %c0_i32_0 : i32, i32
  }
  func.func @transform_12(%arg0: i32) -> (i32, i32) {
    %c0_i32 = arith.constant 0 : i32
    %c0_i32_0 = arith.constant 0 : i32
    %c0_i32_1 = arith.constant 0 : i32
    return %c0_i32, %c0_i32_0 : i32, i32
  }
  func.func @transform_13(%arg0: i32) -> (i32, i32) {
    %c0_i32 = arith.constant 0 : i32
    %c0_i32_0 = arith.constant 0 : i32
    %c0_i32_1 = arith.constant 0 : i32
    return %c0_i32, %c0_i32_0 : i32, i32
  }
  func.func @transform_14(%arg0: i32) -> (i32, i32) {
    %c0_i32 = arith.constant 0 : i32
    %c0_i32_0 = arith.constant 0 : i32
    %c0_i32_1 = arith.constant 0 : i32
    return %c0_i32, %c0_i32_0 : i32, i32
  }
  func.func @transform_15(%arg0: i32) -> (i32, i32) {
    %c0_i32 = arith.constant 0 : i32
    %c0_i32_0 = arith.constant 0 : i32
    %c0_i32_1 = arith.constant 0 : i32
    return %c0_i32, %c0_i32_0 : i32, i32
  }
  func.func @transform_16(%arg0: i32) -> (i32, i32, i32) {
    %c0_i32 = arith.constant 0 : i32
    %c0_i32_0 = arith.constant 0 : i32
    %c0_i32_1 = arith.constant 0 : i32
    return %arg0, %c0_i32, %c0_i32_0 : i32, i32, i32
  }
}

</mosaic_0001>

<llo_original>
// kernel: tpu_custom_call.1
$region0: #{tpu_custom_call.1}
  #allocation0 [shape = 'u32[]', space=smem, size = 0x4, offset = 0x4, fixed_abs, tag = 'smem constant byte address 0x4 - core index']
  #allocation1 [shape = 'u32[144,128]{1,0:T(1,128)}', space=vmem, size = 0x12000, scoped, tag = 'internal scratch']
  #allocation2 [shape = 'f32[1,1]{1,0:T(1,128)S(1)}', space=vmem, size = 0x200, scoped, tag = 'scoped memory for tpu_custom_call.1']
  #allocation3 [shape = 'f32[1,1]{1,0:T(1,128)S(1)}', space=vmem, size = 0x200, scoped, tag = 'scoped memory for tpu_custom_call.1']
  #allocation4 [shape = 'f32[1,1]{1,0:T(1,128)S(1)}', space=vmem, size = 0x200, scoped, tag = 'scoped memory for tpu_custom_call.1']
  %s0 = inlined_call_operand.hbm [shape: f32[2,64,128], index: 0, kind: input, shape index: {}]
  %s1 = inlined_call_operand.vmem [shape: bf16[24,64], index: 1, kind: input, shape index: {}]
  %s2 = inlined_call_operand.vmem [shape: f32[24,1], index: 2, kind: input, shape index: {}]
  %s3 = inlined_call_operand.vmem [shape: bf16[16,128], index: 3, kind: input, shape index: {}]
  %s4 = inlined_call_operand.vmem [shape: f32[8,1], index: 4, kind: input, shape index: {}]
  %s5 = inlined_call_operand.vmem [shape: f32[1,8], index: 5, kind: input, shape index: {}]
  %s6 = inlined_call_operand.vmem [shape: f32[1,3], index: 6, kind: input, shape index: {}]
  %s7 = inlined_call_operand.<no memory space> [shape: f32[1,1], index: 7, kind: input, shape index: {}]
  %s8 = inlined_call_operand.vmem [shape: bf16[24,128], index: 8, kind: input, shape index: {}]
  %s9 = inlined_call_operand.vmem [shape: f32[24,1], index: 9, kind: input, shape index: {}]
  %s10 = inlined_call_operand.vmem [shape: bf16[16,64], index: 10, kind: input, shape index: {}]
  %s11 = inlined_call_operand.vmem [shape: f32[8,1], index: 11, kind: input, shape index: {}]
  %s12 = inlined_call_operand.vmem [shape: f32[1,8], index: 12, kind: input, shape index: {}]
  %s13 = inlined_call_operand.vmem [shape: f32[1,2], index: 13, kind: input, shape index: {}]
  %s14 = inlined_call_operand.<no memory space> [shape: f32[1,1], index: 14, kind: input, shape index: {}]
  %s15 = inlined_call_operand.<no memory space> [shape: f32[1,1], index: 15, kind: input, shape index: {}]
  %s16 = inlined_call_operand.hbm [shape: f32[2,64,128], index: 16, kind: output, shape index: {}]
  %s17 = sld [smem:[#allocation0]]
  $region101: #{tpu_custom_call.1} parent=0
    _
  %s19 = ssub.s32 1, %s17
  %s20 = scalar_select 0, %s19, %s17
  %v21 = vstv %s7
  %22 = vst [vmem:[#allocation2] sm:$0x1] %v21
  %v23 = vstv %s14
  %24 = vst [vmem:[#allocation3] sm:$0x1] %v23
  %v25 = vstv %s15
  %26 = vst [vmem:[#allocation4] sm:$0x1] %v25
  $region1: #{tpu_custom_call.1} parent=0
    #allocation5 [shape = 'u8[65536]{0}', space=vmem, size = 0x10000, scoped, tag = 'input window, operand 0']
    #allocation6 [shape = 's32[2]{0}', space=sflag, size = 0x8, scoped, tag = 'scoped memory for tpu_custom_call.1']
    #allocation7 [shape = 's32[2]{0}', space=sflag, size = 0x8, scoped, tag = 'scoped memory for tpu_custom_call.1']
    #allocation8 [shape = 'u8[65536]{0}', space=vmem, size = 0x10000, scoped, tag = 'output window, operand 0']
    %27 = vsyncpa [#allocation6], 0
    %s28 = scalar_lea.sflag [#allocation6], 1
    %29 = vsyncpa %s28, 0
    %30 = vsyncpa [#allocation7], 0
    %s31 = scalar_lea.sflag [#allocation7], 1
    %32 = vsyncpa %s31, 0
    loop: start=0, step=1, limit=4
    $region2: #{tpu_custom_call.1} parent=1 // loop_pre_header
      _
    $region3: #{tpu_custom_call.1} parent=1 // loop_header
      %s34 = sphi 0, %s38
      %p35 = scmp.ge.s32.totalorder %s34, 4
      %s44 = sphi 0, %s46
      %s47 = sphi 0, %s44
      %s48 = sphi 0, %s47
      %s64 = sphi 0, %s48
      %s68 = sphi 0, %s68
      %s70 = sphi 0, %s68
      %s71 = sphi 0, %s70
      %s85 = sphi 0, %s71
      %s89 = sphi 0, %s89
      %s91 = sphi 0, %s89
      %s92 = sphi 0, %s91
      %s106 = sphi 0, %s92
      %s110 = sphi 0, %s110
      %s112 = sphi 0, %s110
      %s113 = sphi 0, %s112
      %s127 = sphi 0, %s113
      %s131 = sphi 0, %s131
      %s133 = sphi 0, %s131
      %s134 = sphi 0, %s133
      %s148 = sphi 0, %s134
      %s152 = sphi 0, %s152
      %s154 = sphi 0, %s152
      %s155 = sphi 0, %s154
      %s169 = sphi 0, %s155
      %s173 = sphi 0, %s173
      %s175 = sphi 0, %s173
      %s176 = sphi 0, %s175
      %s190 = sphi 0, %s176
      %s194 = sphi 0, %s194
      %s196 = sphi 0, %s194
      %s197 = sphi 0, %s196
      %s211 = sphi 0, %s197
      %s215 = sphi 0, %s215
      %s217 = sphi 0, %s215
      %s218 = sphi 0, %s217
      %s232 = sphi 0, %s218
      %s236 = sphi 0, %s236
      %s238 = sphi 0, %s236
      %s239 = sphi 0, %s238
      %s253 = sphi 0, %s239
      %s257 = sphi 0, %s257
      %s259 = sphi 0, %s257
      %s260 = sphi 0, %s259
      %s274 = sphi 0, %s260
      %s278 = sphi 0, %s278
      %s280 = sphi 0, %s278
      %s281 = sphi 0, %s280
      %s295 = sphi 0, %s281
      %s299 = sphi 0, %s299
      %s301 = sphi 0, %s299
      %s302 = sphi 0, %s301
      %s316 = sphi 0, %s302
      %s320 = sphi 0, %s320
      %s322 = sphi 0, %s320
      %s323 = sphi 0, %s322
      %s337 = sphi 0, %s323
      %s341 = sphi 0, %s341
      %s343 = sphi 0, %s341
      %s344 = sphi 0, %s343
      %s358 = sphi 0, %s344
      %s362 = sphi 0, %s362
      %s364 = sphi 0, %s362
      %s365 = sphi 0, %s364
      %s379 = sphi 0, %s365
      %s385 = sphi 0, %s387
      %s388 = sphi 0, %s385
      %s389 = sphi 0, %s388
      %s405 = sphi 0, %s389
    $region4: #{tpu_custom_call.1} parent=1 // loop_header_branch
      %37 = sbr.rel (%p35) target = $region8
    $region5: #{tpu_custom_call.1} parent=1 // loop_body
      %s39 = ssub.s32 %s34, 1
      %s40 = ssub.s32 %s34, 2
      %s41 = sadd.s32 %s34, 1
      %s42 = ssub.s32 %s34, %s41
      %p43 = scmp.eq.s32.totalorder %s42, 0
      %s45 = sadd.s32 %s44, 1
      %s46 = scalar_select %p43, %s44, %s45
      %p49 = pneg %p43
      %p50 = scmp.eq.s32.totalorder %s34, 1
      %p51 = por %p49, %p50
      %p52 = scmp.ne.s32.totalorder %s44, %s47
      %p53 = scmp.eq.s32.totalorder %s34, 0
      %p54 = por %p52, %p53
      %p55 = scmp.ne.s32.totalorder %s44, %s47
      %p56 = scmp.eq.s32.totalorder %s39, 1
      %p57 = por %p55, %p56
      %p58 = scmp.ne.s32.totalorder %s47, %s48
      %p59 = scmp.eq.s32.totalorder %s39, 0
      %p60 = por %p58, %p59
      %p61 = scmp.ne.s32.totalorder %s47, %s48
      %p62 = scmp.eq.s32.totalorder %s40, 1
      %p63 = por %p61, %p62
      %p65 = scmp.ne.s32.totalorder %s48, %s64
      %p66 = scmp.eq.s32.totalorder %s40, 0
      %p67 = por %p65, %p66
      %s69 = sadd.s32 %s68, 1
      %p72 = scmp.eq.s32.totalorder %s34, 1
      %p73 = scmp.ne.s32.totalorder %s68, %s70
      %p74 = scmp.eq.s32.totalorder %s34, 0
      %p75 = por %p73, %p74
      %p76 = scmp.ne.s32.totalorder %s68, %s70
      %p77 = scmp.eq.s32.totalorder %s39, 1
      %p78 = por %p76, %p77
      %p79 = scmp.ne.s32.totalorder %s70, %s71
      %p80 = scmp.eq.s32.totalorder %s39, 0
      %p81 = por %p79, %p80
      %p82 = scmp.ne.s32.totalorder %s70, %s71
      %p83 = scmp.eq.s32.totalorder %s40, 1
      %p84 = por %p82, %p83
      %p86 = scmp.ne.s32.totalorder %s71, %s85
      %p87 = scmp.eq.s32.totalorder %s40, 0
      %p88 = por %p86, %p87
      %s90 = sadd.s32 %s89, 1
      %p93 = scmp.eq.s32.totalorder %s34, 1
      %p94 = scmp.ne.s32.totalorder %s89, %s91
      %p95 = scmp.eq.s32.totalorder %s34, 0
      %p96 = por %p94, %p95
      %p97 = scmp.ne.s32.totalorder %s89, %s91
      %p98 = scmp.eq.s32.totalorder %s39, 1
      %p99 = por %p97, %p98
      %p100 = scmp.ne.s32.totalorder %s91, %s92
      %p101 = scmp.eq.s32.totalorder %s39, 0
      %p102 = por %p100, %p101
      %p103 = scmp.ne.s32.totalorder %s91, %s92
      %p104 = scmp.eq.s32.totalorder %s40, 1
      %p105 = por %p103, %p104
      %p107 = scmp.ne.s32.totalorder %s92, %s106
      %p108 = scmp.eq.s32.totalorder %s40, 0
      %p109 = por %p107, %p108
      %s111 = sadd.s32 %s110, 1
      %p114 = scmp.eq.s32.totalorder %s34, 1
      %p115 = scmp.ne.s32.totalorder %s110, %s112
      %p116 = scmp.eq.s32.totalorder %s34, 0
      %p117 = por %p115, %p116
      %p118 = scmp.ne.s32.totalorder %s110, %s112
      %p119 = scmp.eq.s32.totalorder %s39, 1
      %p120 = por %p118, %p119
      %p121 = scmp.ne.s32.totalorder %s112, %s113
      %p122 = scmp.eq.s32.totalorder %s39, 0
      %p123 = por %p121, %p122
      %p124 = scmp.ne.s32.totalorder %s112, %s113
      %p125 = scmp.eq.s32.totalorder %s40, 1
      %p126 = por %p124, %p125
      %p128 = scmp.ne.s32.totalorder %s113, %s127
      %p129 = scmp.eq.s32.totalorder %s40, 0
      %p130 = por %p128, %p129
      %s132 = sadd.s32 %s131, 1
      %p135 = scmp.eq.s32.totalorder %s34, 1
      %p136 = scmp.ne.s32.totalorder %s131, %s133
      %p137 = scmp.eq.s32.totalorder %s34, 0
      %p138 = por %p136, %p137
      %p139 = scmp.ne.s32.totalorder %s131, %s133
      %p140 = scmp.eq.s32.totalorder %s39, 1
      %p141 = por %p139, %p140
      %p142 = scmp.ne.s32.totalorder %s133, %s134
      %p143 = scmp.eq.s32.totalorder %s39, 0
      %p144 = por %p142, %p143
      %p145 = scmp.ne.s32.totalorder %s133, %s134
      %p146 = scmp.eq.s32.totalorder %s40, 1
      %p147 = por %p145, %p146
      %p149 = scmp.ne.s32.totalorder %s134, %s148
      %p150 = scmp.eq.s32.totalorder %s40, 0
      %p151 = por %p149, %p150
      %s153 = sadd.s32 %s152, 1
      %p156 = scmp.eq.s32.totalorder %s34, 1
      %p157 = scmp.ne.s32.totalorder %s152, %s154
      %p158 = scmp.eq.s32.totalorder %s34, 0
      %p159 = por %p157, %p158
      %p160 = scmp.ne.s32.totalorder %s152, %s154
      %p161 = scmp.eq.s32.totalorder %s39, 1
      %p162 = por %p160, %p161
      %p163 = scmp.ne.s32.totalorder %s154, %s155
      %p164 = scmp.eq.s32.totalorder %s39, 0
      %p165 = por %p163, %p164
      %p166 = scmp.ne.s32.totalorder %s154, %s155
      %p167 = scmp.eq.s32.totalorder %s40, 1
      %p168 = por %p166, %p167
      %p170 = scmp.ne.s32.totalorder %s155, %s169
      %p171 = scmp.eq.s32.totalorder %s40, 0
      %p172 = por %p170, %p171
      %s174 = sadd.s32 %s173, 1
      %p177 = scmp.eq.s32.totalorder %s34, 1
      %p178 = scmp.ne.s32.totalorder %s173, %s175
      %p179 = scmp.eq.s32.totalorder %s34, 0
      %p180 = por %p178, %p179
      %p181 = scmp.ne.s32.totalorder %s173, %s175
      %p182 = scmp.eq.s32.totalorder %s39, 1
      %p183 = por %p181, %p182
      %p184 = scmp.ne.s32.totalorder %s175, %s176
      %p185 = scmp.eq.s32.totalorder %s39, 0
      %p186 = por %p184, %p185
      %p187 = scmp.ne.s32.totalorder %s175, %s176
      %p188 = scmp.eq.s32.totalorder %s40, 1
      %p189 = por %p187, %p188
      %p191 = scmp.ne.s32.totalorder %s176, %s190
      %p192 = scmp.eq.s32.totalorder %s40, 0
      %p193 = por %p191, %p192
      %s195 = sadd.s32 %s194, 1
      %p198 = scmp.eq.s32.totalorder %s34, 1
      %p199 = scmp.ne.s32.totalorder %s194, %s196
      %p200 = scmp.eq.s32.totalorder %s34, 0
      %p201 = por %p199, %p200
      %p202 = scmp.ne.s32.totalorder %s194, %s196
      %p203 = scmp.eq.s32.totalorder %s39, 1
      %p204 = por %p202, %p203
      %p205 = scmp.ne.s32.totalorder %s196, %s197
      %p206 = scmp.eq.s32.totalorder %s39, 0
      %p207 = por %p205, %p206
      %p208 = scmp.ne.s32.totalorder %s196, %s197
      %p209 = scmp.eq.s32.totalorder %s40, 1
      %p210 = por %p208, %p209
      %p212 = scmp.ne.s32.totalorder %s197, %s211
      %p213 = scmp.eq.s32.totalorder %s40, 0
      %p214 = por %p212, %p213
      %s216 = sadd.s32 %s215, 1
      %p219 = scmp.eq.s32.totalorder %s34, 1
      %p220 = scmp.ne.s32.totalorder %s215, %s217
      %p221 = scmp.eq.s32.totalorder %s34, 0
      %p222 = por %p220, %p221
      %p223 = scmp.ne.s32.totalorder %s215, %s217
      %p224 = scmp.eq.s32.totalorder %s39, 1
      %p225 = por %p223, %p224
      %p226 = scmp.ne.s32.totalorder %s217, %s218
      %p227 = scmp.eq.s32.totalorder %s39, 0
      %p228 = por %p226, %p227
      %p229 = scmp.ne.s32.totalorder %s217, %s218
      %p230 = scmp.eq.s32.totalorder %s40, 1
      %p231 = por %p229, %p230
      %p233 = scmp.ne.s32.totalorder %s218, %s232
      %p234 = scmp.eq.s32.totalorder %s40, 0
      %p235 = por %p233, %p234
      %s237 = sadd.s32 %s236, 1
      %p240 = scmp.eq.s32.totalorder %s34, 1
      %p241 = scmp.ne.s32.totalorder %s236, %s238
      %p242 = scmp.eq.s32.totalorder %s34, 0
      %p243 = por %p241, %p242
      %p244 = scmp.ne.s32.totalorder %s236, %s238
      %p245 = scmp.eq.s32.totalorder %s39, 1
      %p246 = por %p244, %p245
      %p247 = scmp.ne.s32.totalorder %s238, %s239
      %p248 = scmp.eq.s32.totalorder %s39, 0
      %p249 = por %p247, %p248
      %p250 = scmp.ne.s32.totalorder %s238, %s239
      %p251 = scmp.eq.s32.totalorder %s40, 1
      %p252 = por %p250, %p251
      %p254 = scmp.ne.s32.totalorder %s239, %s253
      %p255 = scmp.eq.s32.totalorder %s40, 0
      %p256 = por %p254, %p255
      %s258 = sadd.s32 %s257, 1
      %p261 = scmp.eq.s32.totalorder %s34, 1
      %p262 = scmp.ne.s32.totalorder %s257, %s259
      %p263 = scmp.eq.s32.totalorder %s34, 0
      %p264 = por %p262, %p263
      %p265 = scmp.ne.s32.totalorder %s257, %s259
      %p266 = scmp.eq.s32.totalorder %s39, 1
      %p267 = por %p265, %p266
      %p268 = scmp.ne.s32.totalorder %s259, %s260
      %p269 = scmp.eq.s32.totalorder %s39, 0
      %p270 = por %p268, %p269
      %p271 = scmp.ne.s32.totalorder %s259, %s260
      %p272 = scmp.eq.s32.totalorder %s40, 1
      %p273 = por %p271, %p272
      %p275 = scmp.ne.s32.totalorder %s260, %s274
      %p276 = scmp.eq.s32.totalorder %s40, 0
      %p277 = por %p275, %p276
      %s279 = sadd.s32 %s278, 1
      %p282 = scmp.eq.s32.totalorder %s34, 1
      %p283 = scmp.ne.s32.totalorder %s278, %s280
      %p284 = scmp.eq.s32.totalorder %s34, 0
      %p285 = por %p283, %p284
      %p286 = scmp.ne.s32.totalorder %s278, %s280
      %p287 = scmp.eq.s32.totalorder %s39, 1
      %p288 = por %p286, %p287
      %p289 = scmp.ne.s32.totalorder %s280, %s281
      %p290 = scmp.eq.s32.totalorder %s39, 0
      %p291 = por %p289, %p290
      %p292 = scmp.ne.s32.totalorder %s280, %s281
      %p293 = scmp.eq.s32.totalorder %s40, 1
      %p294 = por %p292, %p293
      %p296 = scmp.ne.s32.totalorder %s281, %s295
      %p297 = scmp.eq.s32.totalorder %s40, 0
      %p298 = por %p296, %p297
      %s300 = sadd.s32 %s299, 1
      %p303 = scmp.eq.s32.totalorder %s34, 1
      %p304 = scmp.ne.s32.totalorder %s299, %s301
      %p305 = scmp.eq.s32.totalorder %s34, 0
      %p306 = por %p304, %p305
      %p307 = scmp.ne.s32.totalorder %s299, %s301
      %p308 = scmp.eq.s32.totalorder %s39, 1
      %p309 = por %p307, %p308
      %p310 = scmp.ne.s32.totalorder %s301, %s302
      %p311 = scmp.eq.s32.totalorder %s39, 0
      %p312 = por %p310, %p311
      %p313 = scmp.ne.s32.totalorder %s301, %s302
      %p314 = scmp.eq.s32.totalorder %s40, 1
      %p315 = por %p313, %p314
      %p317 = scmp.ne.s32.totalorder %s302, %s316
      %p318 = scmp.eq.s32.totalorder %s40, 0
      %p319 = por %p317, %p318
      %s321 = sadd.s32 %s320, 1
      %p324 = scmp.eq.s32.totalorder %s34, 1
      %p325 = scmp.ne.s32.totalorder %s320, %s322
      %p326 = scmp.eq.s32.totalorder %s34, 0
      %p327 = por %p325, %p326
      %p328 = scmp.ne.s32.totalorder %s320, %s322
      %p329 = scmp.eq.s32.totalorder %s39, 1
      %p330 = por %p328, %p329
      %p331 = scmp.ne.s32.totalorder %s322, %s323
      %p332 = scmp.eq.s32.totalorder %s39, 0
      %p333 = por %p331, %p332
      %p334 = scmp.ne.s32.totalorder %s322, %s323
      %p335 = scmp.eq.s32.totalorder %s40, 1
      %p336 = por %p334, %p335
      %p338 = scmp.ne.s32.totalorder %s323, %s337
      %p339 = scmp.eq.s32.totalorder %s40, 0
      %p340 = por %p338, %p339
      %s342 = sadd.s32 %s341, 1
      %p345 = scmp.eq.s32.totalorder %s34, 1
      %p346 = scmp.ne.s32.totalorder %s341, %s343
      %p347 = scmp.eq.s32.totalorder %s34, 0
      %p348 = por %p346, %p347
      %p349 = scmp.ne.s32.totalorder %s341, %s343
      %p350 = scmp.eq.s32.totalorder %s39, 1
      %p351 = por %p349, %p350
      %p352 = scmp.ne.s32.totalorder %s343, %s344
      %p353 = scmp.eq.s32.totalorder %s39, 0
      %p354 = por %p352, %p353
      %p355 = scmp.ne.s32.totalorder %s343, %s344
      %p356 = scmp.eq.s32.totalorder %s40, 1
      %p357 = por %p355, %p356
      %p359 = scmp.ne.s32.totalorder %s344, %s358
      %p360 = scmp.eq.s32.totalorder %s40, 0
      %p361 = por %p359, %p360
      %s363 = sadd.s32 %s362, 1
      %p366 = scmp.eq.s32.totalorder %s34, 1
      %p367 = scmp.ne.s32.totalorder %s362, %s364
      %p368 = scmp.eq.s32.totalorder %s34, 0
      %p369 = por %p367, %p368
      %p370 = scmp.ne.s32.totalorder %s362, %s364
      %p371 = scmp.eq.s32.totalorder %s39, 1
      %p372 = por %p370, %p371
      %p373 = scmp.ne.s32.totalorder %s364, %s365
      %p374 = scmp.eq.s32.totalorder %s39, 0
      %p375 = por %p373, %p374
      %p376 = scmp.ne.s32.totalorder %s364, %s365
      %p377 = scmp.eq.s32.totalorder %s40, 1
      %p378 = por %p376, %p377
      %p380 = scmp.ne.s32.totalorder %s365, %s379
      %p381 = scmp.eq.s32.totalorder %s40, 0
      %p382 = por %p380, %p381
      %s383 = ssub.s32 %s34, %s41
      %p384 = scmp.eq.s32.totalorder %s383, 0
      %s386 = sadd.s32 %s385, 1
      %s387 = scalar_select %p384, %s385, %s386
      %p390 = pneg %p384
      %p391 = scmp.eq.s32.totalorder %s34, 1
      %p392 = por %p390, %p391
      %p393 = scmp.ne.s32.totalorder %s385, %s388
      %p394 = scmp.eq.s32.totalorder %s34, 0
      %p395 = por %p393, %p394
      %p396 = scmp.ne.s32.totalorder %s385, %s388
      %p397 = scmp.eq.s32.totalorder %s39, 1
      %p398 = por %p396, %p397
      %p399 = scmp.ne.s32.totalorder %s388, %s389
      %p400 = scmp.eq.s32.totalorder %s39, 0
      %p401 = por %p399, %p400
      %p402 = scmp.ne.s32.totalorder %s388, %s389
      %p403 = scmp.eq.s32.totalorder %s40, 1
      %p404 = por %p402, %p403
      %p406 = scmp.ne.s32.totalorder %s389, %s405
      %p407 = scmp.eq.s32.totalorder %s40, 0
      %p408 = por %p406, %p407
      %p409 = scmp.le.s32.totalorder 1, %s34
      %p410 = scmp.lt.s32.totalorder %s34, 3
      %p411 = pnand %p409, %p410
      %p412 = pneg %p411
      // Predicated region
      $region9: #{tpu_custom_call.1} parent=5 // pred_check
        _
      $region10: #{tpu_custom_call.1} parent=5 // pred_check_branch
        %414 = sbr.rel (%p411) target = $region12
      $region11: #{tpu_custom_call.1} parent=5 // pred_region
        %s415 = ssub.s32 %s34, 1
        // Predicated region
        $region13: #{tpu_custom_call.1} parent=11 // pred_check
          %p416 = pneg %p81
        $region14: #{tpu_custom_call.1} parent=11 // pred_check_branch
          %418 = sbr.rel (%p416) target = $region16
        $region15: #{tpu_custom_call.1} parent=11 // pred_region
          _
        $region16: #{tpu_custom_call.1} parent=11 // pred_fallthru
          _
        // Predicated region
        $region17: #{tpu_custom_call.1} parent=11 // pred_check
          %p419 = pneg %p102
        $region18: #{tpu_custom_call.1} parent=11 // pred_check_branch
          %421 = sbr.rel (%p419) target = $region20
        $region19: #{tpu_custom_call.1} parent=11 // pred_region
          _
        $region20: #{tpu_custom_call.1} parent=11 // pred_fallthru
          _
        // Predicated region
        $region21: #{tpu_custom_call.1} parent=11 // pred_check
          %p422 = pneg %p123
        $region22: #{tpu_custom_call.1} parent=11 // pred_check_branch
          %424 = sbr.rel (%p422) target = $region24
        $region23: #{tpu_custom_call.1} parent=11 // pred_region
          _
        $region24: #{tpu_custom_call.1} parent=11 // pred_fallthru
          _
        // Predicated region
        $region25: #{tpu_custom_call.1} parent=11 // pred_check
          %p425 = pneg %p144
        $region26: #{tpu_custom_call.1} parent=11 // pred_check_branch
          %427 = sbr.rel (%p425) target = $region28
        $region27: #{tpu_custom_call.1} parent=11 // pred_region
          _
        $region28: #{tpu_custom_call.1} parent=11 // pred_fallthru
          _
        // Predicated region
        $region29: #{tpu_custom_call.1} parent=11 // pred_check
          %p428 = pneg %p165
        $region30: #{tpu_custom_call.1} parent=11 // pred_check_branch
          %430 = sbr.rel (%p428) target = $region32
        $region31: #{tpu_custom_call.1} parent=11 // pred_region
          _
        $region32: #{tpu_custom_call.1} parent=11 // pred_fallthru
          _
        // Predicated region
        $region33: #{tpu_custom_call.1} parent=11 // pred_check
          %p431 = pneg %p186
        $region34: #{tpu_custom_call.1} parent=11 // pred_check_branch
          %433 = sbr.rel (%p431) target = $region36
        $region35: #{tpu_custom_call.1} parent=11 // pred_region
          _
        $region36: #{tpu_custom_call.1} parent=11 // pred_fallthru
          _
        // Predicated region
        $region37: #{tpu_custom_call.1} parent=11 // pred_check
          %p434 = pneg %p207
        $region38: #{tpu_custom_call.1} parent=11 // pred_check_branch
          %436 = sbr.rel (%p434) target = $region40
        $region39: #{tpu_custom_call.1} parent=11 // pred_region
          _
        $region40: #{tpu_custom_call.1} parent=11 // pred_fallthru
          _
        // Predicated region
        $region41: #{tpu_custom_call.1} parent=11 // pred_check
          %p437 = pneg %p228
        $region42: #{tpu_custom_call.1} parent=11 // pred_check_branch
          %439 = sbr.rel (%p437) target = $region44
        $region43: #{tpu_custom_call.1} parent=11 // pred_region
          _
        $region44: #{tpu_custom_call.1} parent=11 // pred_fallthru
          _
        // Predicated region
        $region45: #{tpu_custom_call.1} parent=11 // pred_check
          %p440 = pneg %p249
        $region46: #{tpu_custom_call.1} parent=11 // pred_check_branch
          %442 = sbr.rel (%p440) target = $region48
        $region47: #{tpu_custom_call.1} parent=11 // pred_region
          _
        $region48: #{tpu_custom_call.1} parent=11 // pred_fallthru
          _
        // Predicated region
        $region49: #{tpu_custom_call.1} parent=11 // pred_check
          %p443 = pneg %p270
        $region50: #{tpu_custom_call.1} parent=11 // pred_check_branch
          %445 = sbr.rel (%p443) target = $region52
        $region51: #{tpu_custom_call.1} parent=11 // pred_region
          _
        $region52: #{tpu_custom_call.1} parent=11 // pred_fallthru
          _
        // Predicated region
        $region53: #{tpu_custom_call.1} parent=11 // pred_check
          %p446 = pneg %p291
        $region54: #{tpu_custom_call.1} parent=11 // pred_check_branch
          %448 = sbr.rel (%p446) target = $region56
        $region55: #{tpu_custom_call.1} parent=11 // pred_region
          _
        $region56: #{tpu_custom_call.1} parent=11 // pred_fallthru
          _
        // Predicated region
        $region57: #{tpu_custom_call.1} parent=11 // pred_check
          %p449 = pneg %p312
        $region58: #{tpu_custom_call.1} parent=11 // pred_check_branch
          %451 = sbr.rel (%p449) target = $region60
        $region59: #{tpu_custom_call.1} parent=11 // pred_region
          _
        $region60: #{tpu_custom_call.1} parent=11 // pred_fallthru
          _
        // Predicated region
        $region61: #{tpu_custom_call.1} parent=11 // pred_check
          %p452 = pneg %p333
        $region62: #{tpu_custom_call.1} parent=11 // pred_check_branch
          %454 = sbr.rel (%p452) target = $region64
        $region63: #{tpu_custom_call.1} parent=11 // pred_region
          _
        $region64: #{tpu_custom_call.1} parent=11 // pred_fallthru
          _
        // Predicated region
        $region65: #{tpu_custom_call.1} parent=11 // pred_check
          %p455 = pneg %p354
        $region66: #{tpu_custom_call.1} parent=11 // pred_check_branch
          %457 = sbr.rel (%p455) target = $region68
        $region67: #{tpu_custom_call.1} parent=11 // pred_region
          _
        $region68: #{tpu_custom_call.1} parent=11 // pred_fallthru
          _
        // Predicated region
        $region69: #{tpu_custom_call.1} parent=11 // pred_check
          %p458 = pneg %p375
        $region70: #{tpu_custom_call.1} parent=11 // pred_check_branch
          %460 = sbr.rel (%p458) target = $region72
        $region71: #{tpu_custom_call.1} parent=11 // pred_region
          _
        $region72: #{tpu_custom_call.1} parent=11 // pred_fallthru
          _
      $region12: #{tpu_custom_call.1} parent=5 // pred_fallthru
        _
      %p461 = scmp.lt.s32.totalorder %s34, 2
      // Predicated region
      $region73: #{tpu_custom_call.1} parent=5 // pred_check
        %p462 = pneg %p461
      $region74: #{tpu_custom_call.1} parent=5 // pred_check_branch
        %464 = sbr.rel (%p462) target = $region76
      $region75: #{tpu_custom_call.1} parent=5 // pred_region
        // Predicated region
        $region77: #{tpu_custom_call.1} parent=75 // pred_check
          %p465 = pneg %p54
        $region78: #{tpu_custom_call.1} parent=75 // pred_check_branch
          %467 = sbr.rel (%p465) target = $region80
        $region79: #{tpu_custom_call.1} parent=75 // pred_region
          %s468 = sand.u32 %s44, 1
          %s469 = scalar_lea.sflag [#allocation6], %s468
          %s470 = sand.u32 %s44, 1
          %s471 = smul.addr %s470, 64
          %s472 = scalar_lea.vmem [#allocation5], %s471
          %s474 = ssub.s32 1024, 1024
          %475 = vsyncadd %s469, %s474
          %s476 = smul.addr %s34, 8
          %s477 = smul.addr %s476, 128
          %s478 = scalar_lea.hbm %s0, %s477
          %s479 = sshll.u32 %s472, 4
          %s480 = int_to_ptr.vmem [resolvable:$true] %s479
          %485 = dma.hbm_to_vmem [thread:$0]  %s478, 1024, %s480, %s469, 128, 128, 8
        $region80: #{tpu_custom_call.1} parent=75 // pred_fallthru
          _
      $region76: #{tpu_custom_call.1} parent=5 // pred_fallthru
        _
      %p486 = scmp.le.s32.totalorder 1, %s34
      %p487 = scmp.lt.s32.totalorder %s34, 3
      %p488 = pnand %p486, %p487
      %p489 = pneg %p488
      // Predicated region
      $region81: #{tpu_custom_call.1} parent=5 // pred_check
        _
      $region82: #{tpu_custom_call.1} parent=5 // pred_check_branch
        %491 = sbr.rel (%p488) target = $region84
      $region83: #{tpu_custom_call.1} parent=5 // pred_region
        %s492 = ssub.s32 %s34, 1
        %s493 = sand.u32 %s47, 1
        %s494 = scalar_lea.sflag [#allocation6], %s493
        %s495 = sand.u32 %s47, 1
        %s496 = smul.addr %s495, 64
        %s497 = scalar_lea.vmem [#allocation5], %s496
        // Predicated region
        $region85: #{tpu_custom_call.1} parent=83 // pred_check
          %p498 = pneg %p60
        $region86: #{tpu_custom_call.1} parent=83 // pred_check_branch
          %500 = sbr.rel (%p498) target = $region88
        $region87: #{tpu_custom_call.1} parent=83 // pred_region
          %501 = dma.done %s494, 1024
        $region88: #{tpu_custom_call.1} parent=83 // pred_fallthru
          _
        %s502 = sand.u32 %s47, 1
        %s503 = scalar_lea.sflag [#allocation6], %s502
        %s504 = sand.u32 %s47, 1
        %s505 = smul.addr %s504, 64
        %s506 = scalar_lea.vmem [#allocation5], %s505
        %p507 = pneg %p60
        %p508 = pneg %p57
        %p509 = pneg %p81
        %p510 = pneg %p78
        %p511 = pneg %p102
        %p512 = pneg %p99
        %p513 = pneg %p123
        %p514 = pneg %p120
        %p515 = pneg %p144
        %p516 = pneg %p141
        %p517 = pneg %p165
        %p518 = pneg %p162
        %p519 = pneg %p186
        %p520 = pneg %p183
        %p521 = pneg %p207
        %p522 = pneg %p204
        %p523 = pneg %p228
        %p524 = pneg %p225
        %p525 = pneg %p249
        %p526 = pneg %p246
        %p527 = pneg %p270
        %p528 = pneg %p267
        %p529 = pneg %p291
        %p530 = pneg %p288
        %p531 = pneg %p312
        %p532 = pneg %p309
        %p533 = pneg %p333
        %p534 = pneg %p330
        %p535 = pneg %p354
        %p536 = pneg %p351
        %p537 = pneg %p375
        %p538 = pneg %p372
        %p539 = pneg %p401
        %p540 = pneg %p398
        %s541 = sand.u32 %s388, 1
        %s542 = scalar_lea.sflag [#allocation7], %s541
        %s543 = sand.u32 %s388, 1
        %s544 = smul.addr %s543, 64
        %s545 = scalar_lea.vmem [#allocation8], %s544
        %v547 = vld [vmem:[%s1] sm:$0xf]
        %v548 = vld [vmem:[%s1 + $0x4] sm:$0xf]
        %v549 = vld [vmem:[%s1 + $0x8] sm:$0xf]
        %v550 = vld [vmem:[%s2] sm:$0xff]
        %v551 = vld [vmem:[%s2 + $0x8] sm:$0xff]
        %v552 = vld [vmem:[%s2 + $0x10] sm:$0xff]
        %v553 = vld [vmem:[%s3] sm:$0xf]
        %v554 = vld [vmem:[%s3 + $0x4] sm:$0xf]
        %v555 = vld [vmem:[%s4] sm:$0xff]
        %v556 = vld [vmem:[%s5] sm:$0x1]
        %v557 = vld [vmem:[%s6] sm:$0x1]
        %v558 = vld [vmem:[#allocation2] sm:$0x1]
        %v559 = vld [vmem:[%s8] sm:$0xf]
        %v560 = vld [vmem:[%s8 + $0x4] sm:$0xf]
        %v561 = vld [vmem:[%s8 + $0x8] sm:$0xf]
        %v562 = vld [vmem:[%s9] sm:$0xff]
        %v563 = vld [vmem:[%s9 + $0x8] sm:$0xff]
        %v564 = vld [vmem:[%s9 + $0x10] sm:$0xff]
        %v565 = vld [vmem:[%s10] sm:$0xf]
        %v566 = vld [vmem:[%s10 + $0x4] sm:$0xf]
        %v567 = vld [vmem:[%s11] sm:$0xff]
        %v568 = vld [vmem:[%s12] sm:$0x1]
        %v569 = vld [vmem:[%s13] sm:$0x1]
        %v570 = vld [vmem:[#allocation3] sm:$0x1]
        %v571 = vld [vmem:[#allocation4] sm:$0x1]
        %v572 = vlaneseq
        %v573 = vand.u32 %v572, 127
        %vm574 = vcmp.lt.s32.totalorder %v573, 64
        %v575 = vsel %vm574, 1, 0
        %v576 = vcvt.s32.f32 %v575
        %v577 = vld [vmem:[%s497] sm:$0xff]
        %v578 = vld [vmem:[%s497 + $0x8] sm:$0xff]
        %v579 = vld [vmem:[%s497 + $0x10] sm:$0xff]
        %v580 = vld [vmem:[%s497 + $0x18] sm:$0xff]
        %v581 = vld [vmem:[%s497 + $0x20] sm:$0xff]
        %v582 = vld [vmem:[%s497 + $0x28] sm:$0xff]
        %v583 = vld [vmem:[%s497 + $0x30] sm:$0xff]
        %v584 = vld [vmem:[%s497 + $0x38] sm:$0xff]
        %v585 = vpack.c.bf16 %v578, %v577
        %v586 = vpack.c.bf16 %v580, %v579
        %v587 = vpack.c.bf16 %v582, %v581
        %v588 = vpack.c.bf16 %v584, %v583
        %590 = vset.pattern.permute.xlu0 0
        %591 = vperm.xlu0 %590, %v550
        %v592 = vpop.permute.xlu0 %591
        %595 = vset.pattern.permute.xlu0 0
        %596 = vperm.xlu0 %595, %v551
        %v597 = vpop.permute.xlu0 %596
        %600 = vset.pattern.permute.xlu0 0
        %601 = vperm.xlu0 %600, %v552
        %v602 = vpop.permute.xlu0 %601
        %v607 = vunpack.c.l.b16 %v547
        %v608 = vunpack.c.l.b16 %v548
        %v609 = vunpack.c.l.b16 %v549
        %v610 = vpack.c.b16 %v608, %v607
        %v611 = vpack.c.b16 %v609, %v609
        %vm612 = vcmask 523264
        %v614 = vsel %vm612, %v610, 0
        %v617 = vsel %vm612, %v611, 0
        %619 = vmatprep.subr.bf16.mxu0 0
        %620 = vmatpush1.bf16.msra.mxu0 %v585
        %621 = vmatprep.subr.bf16.mxu0 0
        %622 = vmatpush1.bf16.msra.mxu0 %v586
        %623 = vmatprep.subr.bf16.mxu0 0
        %624 = vmatpush1.bf16.msra.mxu0 %v587
        %625 = vmatprep.subr.bf16.mxu0 0
        %626 = vmatpush1.bf16.msra.mxu0 %v588
        %627 = vmatprep.subr.bf16.mxu0 0
        %628 = vmatpush1.bf16.msra.mxu0 0
        %629 = vmatprep.subr.bf16.mxu0 0
        %630 = vmatpush1.bf16.msra.mxu0 0
        %631 = vmatprep.subr.bf16.mxu0 0
        %632 = vmatpush1.bf16.msra.mxu0 0
        %633 = vmatprep.subr.bf16.mxu0 0
        %634 = vmatpush1.bf16.msra.mxu0 0
        %635 = vmatprep.subr.bf16.mxu0 0
        %636 = vmatpush1.bf16.msra.mxu0 0
        %637 = vmatprep.subr.bf16.mxu0 0
        %638 = vmatpush1.bf16.msra.mxu0 0
        %639 = vmatprep.subr.bf16.mxu0 0
        %640 = vmatpush1.bf16.msra.mxu0 0
        %641 = vmatprep.subr.bf16.mxu0 0
        %642 = vmatpush1.bf16.msra.mxu0 0
        %643 = vmatprep.subr.bf16.mxu0 0
        %644 = vmatpush1.bf16.msra.mxu0 0
        %645 = vmatprep.subr.bf16.mxu0 0
        %646 = vmatpush1.bf16.msra.mxu0 0
        %647 = vmatprep.subr.bf16.mxu0 0
        %648 = vmatpush1.bf16.msra.mxu0 0
        %649 = vmatprep.subr.bf16.mxu0 0
        %650 = vmatpush1.bf16.msra.mxu0 0
        %651 = vmatprep.mubr.bf16.mxu0 0
        %652 = vmatmul.mubr.bf16.gmra.mrb[0].mxu0 %v614
        %v653 = vpop.f32.mrb[0].mxu0
        %v654 = vadd.f32 %v592, %v653
        %v655 = vpop.f32.mrb[0].mxu0
        %v656 = vpop.f32.mrb[0].mxu0
        %v657 = vadd.f32 %v597, %v656
        %v658 = vpop.f32.mrb[0].mxu0
        %659 = vmatprep.mubr.bf16.mxu0 0
        %660 = vmatmul.mubr.bf16.gmra.mrb[0].mxu0 %v617
        %v661 = vpop.f32.mrb[0].mxu0
        %v662 = vadd.f32 %v602, %v661
        %v663 = vpop.f32.mrb[0].mxu0
        %v664 = vpop.f32.mrb[0].mxu0
        %v665 = vpop.f32.mrb[0].mxu0
        %666 = vdwg.mxu0
        %v667 = vmax.f32 %v654, 0.0
        %v668 = vmax.f32 %v657, 0.0
        %v669 = vmax.f32 %v662, 0.0
        %v670 = vmul.f32 %v667, %v576
        %v671 = vmul.f32 %v668, %v576
        %v672 = vmul.f32 %v669, %v576
        %v673 = vpack.c.bf16 %v670, %v670
        %v674 = vpack.c.bf16 %v671, %v671
        %675 = vmatprep.subr.bf16.mxu0 0
        %676 = vmatpush1.bf16.xpose.msra.mxu0 %v674
        %677 = vmatprep.subr.bf16.mxu0 0
        %678 = vmatpush1.bf16.xpose.msra.mxu0 0
        %679 = vmatprep.subr.bf16.mxu0 0
        %680 = vmatpush1.bf16.xpose.msra.mxu0 0
        %681 = vmatprep.subr.bf16.mxu0 0
        %682 = vmatpush1.bf16.xpose.msra.mxu0 0
        %683 = vmatprep.subr.bf16.mxu0 0
        %684 = vmatpush1.bf16.xpose.msra.mxu0 0
        %685 = vmatprep.subr.bf16.mxu0 0
        %686 = vmatpush1.bf16.xpose.msra.mxu0 0
        %687 = vmatprep.subr.bf16.mxu0 0
        %688 = vmatpush1.bf16.xpose.msra.mxu0 0
        %689 = vmatprep.subr.bf16.mxu0 0
        %690 = vmatpush1.bf16.xpose.msra.mxu0 0
        %691 = vmatprep.subr.bf16.mxu0 0
        %692 = vmatpush1.bf16.xpose.msra.mxu0 0
        %693 = vmatprep.subr.bf16.mxu0 0
        %694 = vmatpush1.bf16.xpose.msra.mxu0 0
        %695 = vmatprep.subr.bf16.mxu0 0
        %696 = vmatpush1.bf16.xpose.msra.mxu0 0
        %697 = vmatprep.subr.bf16.mxu0 0
        %698 = vmatpush1.bf16.xpose.msra.mxu0 0
        %699 = vmatprep.subr.bf16.mxu0 0
        %700 = vmatpush1.bf16.xpose.msra.mxu0 0
        %701 = vmatprep.subr.bf16.mxu0 0
        %702 = vmatpush1.bf16.xpose.msra.mxu0 0
        %703 = vmatprep.subr.bf16.mxu0 0
        %704 = vmatpush1.bf16.xpose.msra.mxu0 0
        %705 = vmatprep.subr.bf16.mxu0 0
        %706 = vmatpush1.bf16.xpose.msra.mxu0 0
        %707 = vmatprep.mubr.bf16.mxu0 0
        %708 = vmatmul.mubr.bf16.gmra.mrb[0].mxu0 %v553
        %v709 = vpop.f32.mrb[0].mxu0
        %v710 = vadd.f32 0.0, %v709
        %v711 = vpop.f32.mrb[0].mxu0
        %v712 = vpop.f32.mrb[0].mxu0
        %v713 = vpop.f32.mrb[0].mxu0
        %714 = vdwg.mxu0
        %715 = vmatprep.subr.bf16.mxu0 0
        %716 = vmatpush1.bf16.xpose.msra.mxu0 %v673
        %717 = vmatprep.subr.bf16.mxu0 0
        %718 = vmatpush1.bf16.xpose.msra.mxu0 0
        %719 = vmatprep.subr.bf16.mxu0 0
        %720 = vmatpush1.bf16.xpose.msra.mxu0 0
        %721 = vmatprep.subr.bf16.mxu0 0
        %722 = vmatpush1.bf16.xpose.msra.mxu0 0
        %723 = vmatprep.subr.bf16.mxu0 0
        %724 = vmatpush1.bf16.xpose.msra.mxu0 0
        %725 = vmatprep.subr.bf16.mxu0 0
        %726 = vmatpush1.bf16.xpose.msra.mxu0 0
        %727 = vmatprep.subr.bf16.mxu0 0
        %728 = vmatpush1.bf16.xpose.msra.mxu0 0
        %729 = vmatprep.subr.bf16.mxu0 0
        %730 = vmatpush1.bf16.xpose.msra.mxu0 0
        %731 = vmatprep.subr.bf16.mxu0 0
        %732 = vmatpush1.bf16.xpose.msra.mxu0 0
        %733 = vmatprep.subr.bf16.mxu0 0
        %734 = vmatpush1.bf16.xpose.msra.mxu0 0
        %735 = vmatprep.subr.bf16.mxu0 0
        %736 = vmatpush1.bf16.xpose.msra.mxu0 0
        %737 = vmatprep.subr.bf16.mxu0 0
        %738 = vmatpush1.bf16.xpose.msra.mxu0 0
        %739 = vmatprep.subr.bf16.mxu0 0
        %740 = vmatpush1.bf16.xpose.msra.mxu0 0
        %741 = vmatprep.subr.bf16.mxu0 0
        %742 = vmatpush1.bf16.xpose.msra.mxu0 0
        %743 = vmatprep.subr.bf16.mxu0 0
        %744 = vmatpush1.bf16.xpose.msra.mxu0 0
        %745 = vmatprep.subr.bf16.mxu0 0
        %746 = vmatpush1.bf16.xpose.msra.mxu0 0
        %747 = vmatprep.mubr.bf16.mxu0 0
        %748 = vmatmul.mubr.bf16.gmra.mrb[0].mxu0 %v554
        %v749 = vpop.f32.mrb[0].mxu0
        %v750 = vadd.f32 0.0, %v749
        %v751 = vpop.f32.mrb[0].mxu0
        %v752 = vpop.f32.mrb[0].mxu0
        %v753 = vpop.f32.mrb[0].mxu0
        %754 = vdwg.mxu0
        %v755 = vpack.c.bf16 %v710, %v710
        %v756 = vpack.c.bf16 %v750, %v750
        %vm757 = vcmask 64512
        %v759 = vsel %vm757, %v756, 0
        %vm761 = vcmask 1043456
        %v763 = vsel %vm761, %v674, 0
        %765 = vmatprep.subr.bf16.mxu0 0
        %766 = vmatpush1.bf16.msra.mxu0 %v763
        %767 = vmatprep.subr.bf16.mxu0 0
        %768 = vmatpush1.bf16.msra.mxu0 0
        %769 = vmatprep.subr.bf16.mxu0 0
        %770 = vmatpush1.bf16.msra.mxu0 0
        %771 = vmatprep.subr.bf16.mxu0 0
        %772 = vmatpush1.bf16.msra.mxu0 0
        %773 = vmatprep.subr.bf16.mxu0 0
        %774 = vmatpush1.bf16.msra.mxu0 0
        %775 = vmatprep.subr.bf16.mxu0 0
        %776 = vmatpush1.bf16.msra.mxu0 0
        %777 = vmatprep.subr.bf16.mxu0 0
        %778 = vmatpush1.bf16.msra.mxu0 0
        %779 = vmatprep.subr.bf16.mxu0 0
        %780 = vmatpush1.bf16.msra.mxu0 0
        %781 = vmatprep.subr.bf16.mxu0 0
        %782 = vmatpush1.bf16.msra.mxu0 0
        %783 = vmatprep.subr.bf16.mxu0 0
        %784 = vmatpush1.bf16.msra.mxu0 0
        %785 = vmatprep.subr.bf16.mxu0 0
        %786 = vmatpush1.bf16.msra.mxu0 0
        %787 = vmatprep.subr.bf16.mxu0 0
        %788 = vmatpush1.bf16.msra.mxu0 0
        %789 = vmatprep.subr.bf16.mxu0 0
        %790 = vmatpush1.bf16.msra.mxu0 0
        %791 = vmatprep.subr.bf16.mxu0 0
        %792 = vmatpush1.bf16.msra.mxu0 0
        %793 = vmatprep.subr.bf16.mxu0 0
        %794 = vmatpush1.bf16.msra.mxu0 0
        %795 = vmatprep.subr.bf16.mxu0 0
        %796 = vmatpush1.bf16.msra.mxu0 0
        %797 = vmatprep.mubr.bf16.mxu0 0
        %798 = vmatmul.mubr.bf16.gmra.mrb[0].mxu0 %v759
        %v799 = vpop.f32.mrb[0].mxu0
        %v800 = vadd.f32 0.0, %v799
        %v801 = vpop.f32.mrb[0].mxu0
        %v802 = vpop.f32.mrb[0].mxu0
        %v803 = vpop.f32.mrb[0].mxu0
        %804 = vdwg.mxu0
        %v806 = vsel %vm757, %v755, 0
        %v809 = vsel %vm761, %v673, 0
        %811 = vmatprep.subr.bf16.mxu0 0
        %812 = vmatpush1.bf16.msra.mxu0 %v809
        %813 = vmatprep.subr.bf16.mxu0 0
        %814 = vmatpush1.bf16.msra.mxu0 0
        %815 = vmatprep.subr.bf16.mxu0 0
        %816 = vmatpush1.bf16.msra.mxu0 0
        %817 = vmatprep.subr.bf16.mxu0 0
        %818 = vmatpush1.bf16.msra.mxu0 0
        %819 = vmatprep.subr.bf16.mxu0 0
        %820 = vmatpush1.bf16.msra.mxu0 0
        %821 = vmatprep.subr.bf16.mxu0 0
        %822 = vmatpush1.bf16.msra.mxu0 0
        %823 = vmatprep.subr.bf16.mxu0 0
        %824 = vmatpush1.bf16.msra.mxu0 0
        %825 = vmatprep.subr.bf16.mxu0 0
        %826 = vmatpush1.bf16.msra.mxu0 0
        %827 = vmatprep.subr.bf16.mxu0 0
        %828 = vmatpush1.bf16.msra.mxu0 0
        %829 = vmatprep.subr.bf16.mxu0 0
        %830 = vmatpush1.bf16.msra.mxu0 0
        %831 = vmatprep.subr.bf16.mxu0 0
        %832 = vmatpush1.bf16.msra.mxu0 0
        %833 = vmatprep.subr.bf16.mxu0 0
        %834 = vmatpush1.bf16.msra.mxu0 0
        %835 = vmatprep.subr.bf16.mxu0 0
        %836 = vmatpush1.bf16.msra.mxu0 0
        %837 = vmatprep.subr.bf16.mxu0 0
        %838 = vmatpush1.bf16.msra.mxu0 0
        %839 = vmatprep.subr.bf16.mxu0 0
        %840 = vmatpush1.bf16.msra.mxu0 0
        %841 = vmatprep.subr.bf16.mxu0 0
        %842 = vmatpush1.bf16.msra.mxu0 0
        %843 = vmatprep.mubr.bf16.mxu0 0
        %844 = vmatmul.mubr.bf16.gmra.mrb[0].mxu0 %v806
        %v845 = vpop.f32.mrb[0].mxu0
        %v846 = vadd.f32 %v800, %v845
        %v847 = vpop.f32.mrb[0].mxu0
        %v848 = vpop.f32.mrb[0].mxu0
        %v849 = vpop.f32.mrb[0].mxu0
        %850 = vdwg.mxu0
        %852 = vset.pattern.permute.xlu0 0
        %853 = vperm.xlu0 %852, %v555
        %v854 = vpop.permute.xlu0 %853
        %v856 = vadd.f32 %v846, %v854
        %v857 = vmax.f32 %v856, 0.0
        %v858 = vrot.slane %v672, 4
        %v859 = vadd.f32 %v672, %v858
        %v860 = vrot.slane %v859, 2
        %v861 = vadd.f32 %v859, %v860
        %v862 = vrot.slane %v861, 1
        %v863 = vadd.f32 %v861, %v862
        %v864 = vrcp.pop 8.0
        %v865 = vmul.f32 %v863, %v864
        %867 = vset.pattern.permute.xlu0 0
        %868 = vperm.xlu0 %867, %v557
        %v869 = vpop.permute.xlu0 %868
        %v871 = vlaneseq
        %v872 = vshrl.u32 %v871, 7
        %v873 = vsub.s32 0, %v872
        %v874 = vrot.slane %v869, %v873
        %v875 = vmul.f32 %v874, %v865
        %v877 = vsel %vm757, %v556, 0
        %879 = vmatprep.subr.mxu0 0.0
        %880 = vmatpush1.msra.mxu0 %v857
        %881 = vmatprep.subr.mxu0 0.0
        %882 = vmatpush1.msra.mxu0 0.0
        %883 = vmatprep.subr.mxu0 0.0
        %884 = vmatpush1.msra.mxu0 0.0
        %885 = vmatprep.subr.mxu0 0.0
        %886 = vmatpush1.msra.mxu0 0.0
        %887 = vmatprep.subr.mxu0 0.0
        %888 = vmatpush1.msra.mxu0 0.0
        %889 = vmatprep.subr.mxu0 0.0
        %890 = vmatpush1.msra.mxu0 0.0
        %891 = vmatprep.subr.mxu0 0.0
        %892 = vmatpush1.msra.mxu0 0.0
        %893 = vmatprep.subr.mxu0 0.0
        %894 = vmatpush1.msra.mxu0 0.0
        %895 = vmatprep.subr.mxu0 0.0
        %896 = vmatpush1.msra.mxu0 0.0
        %897 = vmatprep.subr.mxu0 0.0
        %898 = vmatpush1.msra.mxu0 0.0
        %899 = vmatprep.subr.mxu0 0.0
        %900 = vmatpush1.msra.mxu0 0.0
        %901 = vmatprep.subr.mxu0 0.0
        %902 = vmatpush1.msra.mxu0 0.0
        %903 = vmatprep.subr.mxu0 0.0
        %904 = vmatpush1.msra.mxu0 0.0
        %905 = vmatprep.subr.mxu0 0.0
        %906 = vmatpush1.msra.mxu0 0.0
        %907 = vmatprep.subr.mxu0 0.0
        %908 = vmatpush1.msra.mxu0 0.0
        %909 = vmatprep.subr.mxu0 0.0
        %910 = vmatpush1.msra.mxu0 0.0
        %911 = vmatprep.subr.mxu0 0.0
        %912 = vmatpush1.msra.mxu0 0.0
        %913 = vmatprep.subr.mxu0 0.0
        %914 = vmatpush1.msra.mxu0 0.0
        %915 = vmatprep.subr.mxu0 0.0
        %916 = vmatpush1.msra.mxu0 0.0
        %917 = vmatprep.subr.mxu0 0.0
        %918 = vmatpush1.msra.mxu0 0.0
        %919 = vmatprep.subr.mxu0 0.0
        %920 = vmatpush1.msra.mxu0 0.0
        %921 = vmatprep.subr.mxu0 0.0
        %922 = vmatpush1.msra.mxu0 0.0
        %923 = vmatprep.subr.mxu0 0.0
        %924 = vmatpush1.msra.mxu0 0.0
        %925 = vmatprep.subr.mxu0 0.0
        %926 = vmatpush1.msra.mxu0 0.0
        %927 = vmatprep.subr.mxu0 0.0
        %928 = vmatpush1.msra.mxu0 0.0
        %929 = vmatprep.subr.mxu0 0.0
        %930 = vmatpush1.msra.mxu0 0.0
        %931 = vmatprep.subr.mxu0 0.0
        %932 = vmatpush1.msra.mxu0 0.0
        %933 = vmatprep.subr.mxu0 0.0
        %934 = vmatpush1.msra.mxu0 0.0
        %935 = vmatprep.subr.mxu0 0.0
        %936 = vmatpush1.msra.mxu0 0.0
        %937 = vmatprep.subr.mxu0 0.0
        %938 = vmatpush1.msra.mxu0 0.0
        %939 = vmatprep.subr.mxu0 0.0
        %940 = vmatpush1.msra.mxu0 0.0
        %941 = vmatprep.subr.mxu0 0.0
        %942 = vmatpush1.msra.mxu0 0.0
        %943 = vmatprep.mubr.f32.mxu0 0.0
        %944 = vmatmul.mubr.f32.gmra.mrb[0].mxu0 %v877
        %v945 = vpop.f32.mrb[0].mxu0
        %v946 = vadd.f32 0.0, %v945
        %v947 = vpop.f32.mrb[0].mxu0
        %948 = vdwg.mxu0
        %v949 = vadd.f32 %v875, %v946
        %950 = vset.pattern.permute.xlu0 1
        %951 = vperm.xlu0 %950, %v557
        %v952 = vpop.permute.xlu0 %951
        %v954 = vlaneseq
        %v955 = vshrl.u32 %v954, 7
        %v956 = vsub.s32 0, %v955
        %v957 = vrot.slane %v952, %v956
        %v958 = vadd.f32 %v949, %v957
        %v959 = vmax.f32 %v958, 0.0
        %960 = vset.pattern.permute.xlu0 2
        %961 = vperm.xlu0 %960, %v557
        %v962 = vpop.permute.xlu0 %961
        %v964 = vlaneseq
        %v965 = vshrl.u32 %v964, 7
        %v966 = vsub.s32 0, %v965
        %v967 = vrot.slane %v962, %v966
        %v968 = vmul.f32 %v967, %v959
        %v969 = vadd.f32 %v968, 0.0
        %971 = vset.pattern.permute.xlu0 0
        %972 = vperm.xlu0 %971, %v558
        %v973 = vpop.permute.xlu0 %972
        %v975 = vlaneseq
        %v976 = vshrl.u32 %v975, 7
        %v977 = vsub.s32 0, %v976
        %v978 = vrot.slane %v973, %v977
        %v979 = vadd.f32 %v969, %v978
        %v980 = vxor.u32 %v979, 2147483648
        %v981 = vmul.f32 %v980, 1.442695
        %v982 = vpow.pop %v981
        %v983 = vadd.f32 %v982, 1.0
        %v984 = vrcp.pop %v983
        %v985 = vmul.f32 1.0, %v984
        %v986 = vlaneseq
        %v987 = vshrl.u32 %v986, 7
        %v988 = vsub.s32 0, %v987
        %v989 = vrot.slane %v985, %v988
        %v990 = vmul.f32 %v989, %v577
        %v991 = vmul.f32 %v989, %v578
        %v992 = vmul.f32 %v989, %v579
        %v993 = vmul.f32 %v989, %v580
        %v994 = vmul.f32 %v989, %v581
        %v995 = vmul.f32 %v989, %v582
        %v996 = vmul.f32 %v989, %v583
        %v997 = vmul.f32 %v989, %v584
        %v998 = vpack.c.bf16 %v991, %v990
        %v999 = vpack.c.bf16 %v993, %v992
        %v1000 = vpack.c.bf16 %v995, %v994
        %v1001 = vpack.c.bf16 %v997, %v996
        %1003 = vset.pattern.permute.xlu0 0
        %1004 = vperm.xlu0 %1003, %v562
        %v1005 = vpop.permute.xlu0 %1004
        %1008 = vset.pattern.permute.xlu0 0
        %1009 = vperm.xlu0 %1008, %v563
        %v1010 = vpop.permute.xlu0 %1009
        %1013 = vset.pattern.permute.xlu0 0
        %1014 = vperm.xlu0 %1013, %v564
        %v1015 = vpop.permute.xlu0 %1014
        %v1020 = vunpack.c.l.b16 %v559
        %v1021 = vunpack.c.l.b16 %v560
        %v1022 = vunpack.c.l.b16 %v561
        %v1023 = vpack.c.b16 %v1021, %v1020
        %v1024 = vpack.c.b16 %v1022, %v1022
        %1027 = vmatprep.subr.bf16.mxu0 0
        %1028 = vmatpush1.bf16.xpose.msra.mxu0 %v998
        %1029 = vmatprep.subr.bf16.mxu0 0
        %1030 = vmatpush1.bf16.xpose.msra.mxu0 %v999
        %1031 = vmatprep.subr.bf16.mxu0 0
        %1032 = vmatpush1.bf16.xpose.msra.mxu0 %v1000
        %1033 = vmatprep.subr.bf16.mxu0 0
        %1034 = vmatpush1.bf16.xpose.msra.mxu0 %v1001
        %1035 = vmatprep.subr.bf16.mxu0 0
        %1036 = vmatpush1.bf16.xpose.msra.mxu0 0
        %1037 = vmatprep.subr.bf16.mxu0 0
        %1038 = vmatpush1.bf16.xpose.msra.mxu0 0
        %1039 = vmatprep.subr.bf16.mxu0 0
        %1040 = vmatpush1.bf16.xpose.msra.mxu0 0
        %1041 = vmatprep.subr.bf16.mxu0 0
        %1042 = vmatpush1.bf16.xpose.msra.mxu0 0
        %1043 = vmatprep.subr.bf16.mxu0 0
        %1044 = vmatpush1.bf16.xpose.msra.mxu0 0
        %1045 = vmatprep.subr.bf16.mxu0 0
        %1046 = vmatpush1.bf16.xpose.msra.mxu0 0
        %1047 = vmatprep.subr.bf16.mxu0 0
        %1048 = vmatpush1.bf16.xpose.msra.mxu0 0
        %1049 = vmatprep.subr.bf16.mxu0 0
        %1050 = vmatpush1.bf16.xpose.msra.mxu0 0
        %1051 = vmatprep.subr.bf16.mxu0 0
        %1052 = vmatpush1.bf16.xpose.msra.mxu0 0
        %1053 = vmatprep.subr.bf16.mxu0 0
        %1054 = vmatpush1.bf16.xpose.msra.mxu0 0
        %1055 = vmatprep.subr.bf16.mxu0 0
        %1056 = vmatpush1.bf16.xpose.msra.mxu0 0
        %1057 = vmatprep.subr.bf16.mxu0 0
        %1058 = vmatpush1.bf16.xpose.msra.mxu0 0
        %1059 = vmatprep.mubr.bf16.mxu0 0
        %1060 = vmatmul.mubr.bf16.gmra.mrb[0].mxu0 %v1023
        %v1061 = vpop.f32.mrb[0].mxu0
        %v1062 = vadd.f32 %v1005, %v1061
        %v1063 = vpop.f32.mrb[0].mxu0
        %v1064 = vpop.f32.mrb[0].mxu0
        %v1065 = vadd.f32 %v1010, %v1064
        %v1066 = vpop.f32.mrb[0].mxu0
        %1067 = vmatprep.mubr.bf16.mxu0 0
        %1068 = vmatmul.mubr.bf16.gmra.mrb[0].mxu0 %v1024
        %v1069 = vpop.f32.mrb[0].mxu0
        %v1070 = vadd.f32 %v1015, %v1069
        %v1071 = vpop.f32.mrb[0].mxu0
        %v1072 = vpop.f32.mrb[0].mxu0
        %v1073 = vpop.f32.mrb[0].mxu0
        %1074 = vdwg.mxu0
        %v1075 = vmax.f32 %v1062, 0.0
        %v1076 = vmax.f32 %v1065, 0.0
        %v1077 = vmax.f32 %v1070, 0.0
        %v1078 = vpack.c.bf16 %v1075, %v1075
        %v1079 = vpack.c.bf16 %v1076, %v1076
        %v1081 = vsel %vm612, %v565, 0
        %v1084 = vsel %vm612, %v1079, 0
        %1086 = vmatprep.subr.bf16.mxu0 0
        %1087 = vmatpush1.bf16.xpose.msra.mxu0 %v1084
        %1088 = vmatprep.subr.bf16.mxu0 0
        %1089 = vmatpush1.bf16.xpose.msra.mxu0 0
        %1090 = vmatprep.subr.bf16.mxu0 0
        %1091 = vmatpush1.bf16.xpose.msra.mxu0 0
        %1092 = vmatprep.subr.bf16.mxu0 0
        %1093 = vmatpush1.bf16.xpose.msra.mxu0 0
        %1094 = vmatprep.subr.bf16.mxu0 0
        %1095 = vmatpush1.bf16.xpose.msra.mxu0 0
        %1096 = vmatprep.subr.bf16.mxu0 0
        %1097 = vmatpush1.bf16.xpose.msra.mxu0 0
        %1098 = vmatprep.subr.bf16.mxu0 0
        %1099 = vmatpush1.bf16.xpose.msra.mxu0 0
        %1100 = vmatprep.subr.bf16.mxu0 0
        %1101 = vmatpush1.bf16.xpose.msra.mxu0 0
        %1102 = vmatprep.subr.bf16.mxu0 0
        %1103 = vmatpush1.bf16.xpose.msra.mxu0 0
        %1104 = vmatprep.subr.bf16.mxu0 0
        %1105 = vmatpush1.bf16.xpose.msra.mxu0 0
        %1106 = vmatprep.subr.bf16.mxu0 0
        %1107 = vmatpush1.bf16.xpose.msra.mxu0 0
        %1108 = vmatprep.subr.bf16.mxu0 0
        %1109 = vmatpush1.bf16.xpose.msra.mxu0 0
        %1110 = vmatprep.subr.bf16.mxu0 0
        %1111 = vmatpush1.bf16.xpose.msra.mxu0 0
        %1112 = vmatprep.subr.bf16.mxu0 0
        %1113 = vmatpush1.bf16.xpose.msra.mxu0 0
        %1114 = vmatprep.subr.bf16.mxu0 0
        %1115 = vmatpush1.bf16.xpose.msra.mxu0 0
        %1116 = vmatprep.subr.bf16.mxu0 0
        %1117 = vmatpush1.bf16.xpose.msra.mxu0 0
        %1118 = vmatprep.mubr.bf16.mxu0 0
        %1119 = vmatmul.mubr.bf16.gmra.mrb[0].mxu0 %v1081
        %v1120 = vpop.f32.mrb[0].mxu0
        %v1121 = vadd.f32 0.0, %v1120
        %v1122 = vpop.f32.mrb[0].mxu0
        %v1123 = vpop.f32.mrb[0].mxu0
        %v1124 = vpop.f32.mrb[0].mxu0
        %1125 = vdwg.mxu0
        %v1127 = vsel %vm612, %v566, 0
        %v1130 = vsel %vm612, %v1078, 0
        %1132 = vmatprep.subr.bf16.mxu0 0
        %1133 = vmatpush1.bf16.xpose.msra.mxu0 %v1130
        %1134 = vmatprep.subr.bf16.mxu0 0
        %1135 = vmatpush1.bf16.xpose.msra.mxu0 0
        %1136 = vmatprep.subr.bf16.mxu0 0
        %1137 = vmatpush1.bf16.xpose.msra.mxu0 0
        %1138 = vmatprep.subr.bf16.mxu0 0
        %1139 = vmatpush1.bf16.xpose.msra.mxu0 0
        %1140 = vmatprep.subr.bf16.mxu0 0
        %1141 = vmatpush1.bf16.xpose.msra.mxu0 0
        %1142 = vmatprep.subr.bf16.mxu0 0
        %1143 = vmatpush1.bf16.xpose.msra.mxu0 0
        %1144 = vmatprep.subr.bf16.mxu0 0
        %1145 = vmatpush1.bf16.xpose.msra.mxu0 0
        %1146 = vmatprep.subr.bf16.mxu0 0
        %1147 = vmatpush1.bf16.xpose.msra.mxu0 0
        %1148 = vmatprep.subr.bf16.mxu0 0
        %1149 = vmatpush1.bf16.xpose.msra.mxu0 0
        %1150 = vmatprep.subr.bf16.mxu0 0
        %1151 = vmatpush1.bf16.xpose.msra.mxu0 0
        %1152 = vmatprep.subr.bf16.mxu0 0
        %1153 = vmatpush1.bf16.xpose.msra.mxu0 0
        %1154 = vmatprep.subr.bf16.mxu0 0
        %1155 = vmatpush1.bf16.xpose.msra.mxu0 0
        %1156 = vmatprep.subr.bf16.mxu0 0
        %1157 = vmatpush1.bf16.xpose.msra.mxu0 0
        %1158 = vmatprep.subr.bf16.mxu0 0
        %1159 = vmatpush1.bf16.xpose.msra.mxu0 0
        %1160 = vmatprep.subr.bf16.mxu0 0
        %1161 = vmatpush1.bf16.xpose.msra.mxu0 0
        %1162 = vmatprep.subr.bf16.mxu0 0
        %1163 = vmatpush1.bf16.xpose.msra.mxu0 0
        %1164 = vmatprep.mubr.bf16.mxu0 0
        %1165 = vmatmul.mubr.bf16.gmra.mrb[0].mxu0 %v1127
        %v1166 = vpop.f32.mrb[0].mxu0
        %v1167 = vadd.f32 0.0, %v1166
        %v1168 = vpop.f32.mrb[0].mxu0
        %v1169 = vpop.f32.mrb[0].mxu0
        %v1170 = vpop.f32.mrb[0].mxu0
        %1171 = vdwg.mxu0
        %v1172 = vpack.c.bf16 %v1121, %v1121
        %v1173 = vpack.c.bf16 %v1167, %v1167
        %v1175 = vsel %vm757, %v1173, 0
        %v1177 = vsel %vm761, %v1079, 0
        %1179 = vmatprep.subr.bf16.mxu0 0
        %1180 = vmatpush1.bf16.msra.mxu0 %v1177
        %1181 = vmatprep.subr.bf16.mxu0 0
        %1182 = vmatpush1.bf16.msra.mxu0 0
        %1183 = vmatprep.subr.bf16.mxu0 0
        %1184 = vmatpush1.bf16.msra.mxu0 0
        %1185 = vmatprep.subr.bf16.mxu0 0
        %1186 = vmatpush1.bf16.msra.mxu0 0
        %1187 = vmatprep.subr.bf16.mxu0 0
        %1188 = vmatpush1.bf16.msra.mxu0 0
        %1189 = vmatprep.subr.bf16.mxu0 0
        %1190 = vmatpush1.bf16.msra.mxu0 0
        %1191 = vmatprep.subr.bf16.mxu0 0
        %1192 = vmatpush1.bf16.msra.mxu0 0
        %1193 = vmatprep.subr.bf16.mxu0 0
        %1194 = vmatpush1.bf16.msra.mxu0 0
        %1195 = vmatprep.subr.bf16.mxu0 0
        %1196 = vmatpush1.bf16.msra.mxu0 0
        %1197 = vmatprep.subr.bf16.mxu0 0
        %1198 = vmatpush1.bf16.msra.mxu0 0
        %1199 = vmatprep.subr.bf16.mxu0 0
        %1200 = vmatpush1.bf16.msra.mxu0 0
        %1201 = vmatprep.subr.bf16.mxu0 0
        %1202 = vmatpush1.bf16.msra.mxu0 0
        %1203 = vmatprep.subr.bf16.mxu0 0
        %1204 = vmatpush1.bf16.msra.mxu0 0
        %1205 = vmatprep.subr.bf16.mxu0 0
        %1206 = vmatpush1.bf16.msra.mxu0 0
        %1207 = vmatprep.subr.bf16.mxu0 0
        %1208 = vmatpush1.bf16.msra.mxu0 0
        %1209 = vmatprep.subr.bf16.mxu0 0
        %1210 = vmatpush1.bf16.msra.mxu0 0
        %1211 = vmatprep.mubr.bf16.mxu0 0
        %1212 = vmatmul.mubr.bf16.gmra.mrb[0].mxu0 %v1175
        %v1213 = vpop.f32.mrb[0].mxu0
        %v1214 = vadd.f32 0.0, %v1213
        %v1215 = vpop.f32.mrb[0].mxu0
        %v1216 = vpop.f32.mrb[0].mxu0
        %v1217 = vpop.f32.mrb[0].mxu0
        %1218 = vdwg.mxu0
        %v1220 = vsel %vm757, %v1172, 0
        %v1222 = vsel %vm761, %v1078, 0
        %1224 = vmatprep.subr.bf16.mxu0 0
        %1225 = vmatpush1.bf16.msra.mxu0 %v1222
        %1226 = vmatprep.subr.bf16.mxu0 0
        %1227 = vmatpush1.bf16.msra.mxu0 0
        %1228 = vmatprep.subr.bf16.mxu0 0
        %1229 = vmatpush1.bf16.msra.mxu0 0
        %1230 = vmatprep.subr.bf16.mxu0 0
        %1231 = vmatpush1.bf16.msra.mxu0 0
        %1232 = vmatprep.subr.bf16.mxu0 0
        %1233 = vmatpush1.bf16.msra.mxu0 0
        %1234 = vmatprep.subr.bf16.mxu0 0
        %1235 = vmatpush1.bf16.msra.mxu0 0
        %1236 = vmatprep.subr.bf16.mxu0 0
        %1237 = vmatpush1.bf16.msra.mxu0 0
        %1238 = vmatprep.subr.bf16.mxu0 0
        %1239 = vmatpush1.bf16.msra.mxu0 0
        %1240 = vmatprep.subr.bf16.mxu0 0
        %1241 = vmatpush1.bf16.msra.mxu0 0
        %1242 = vmatprep.subr.bf16.mxu0 0
        %1243 = vmatpush1.bf16.msra.mxu0 0
        %1244 = vmatprep.subr.bf16.mxu0 0
        %1245 = vmatpush1.bf16.msra.mxu0 0
        %1246 = vmatprep.subr.bf16.mxu0 0
        %1247 = vmatpush1.bf16.msra.mxu0 0
        %1248 = vmatprep.subr.bf16.mxu0 0
        %1249 = vmatpush1.bf16.msra.mxu0 0
        %1250 = vmatprep.subr.bf16.mxu0 0
        %1251 = vmatpush1.bf16.msra.mxu0 0
        %1252 = vmatprep.subr.bf16.mxu0 0
        %1253 = vmatpush1.bf16.msra.mxu0 0
        %1254 = vmatprep.subr.bf16.mxu0 0
        %1255 = vmatpush1.bf16.msra.mxu0 0
        %1256 = vmatprep.mubr.bf16.mxu0 0
        %1257 = vmatmul.mubr.bf16.gmra.mrb[0].mxu0 %v1220
        %v1258 = vpop.f32.mrb[0].mxu0
        %v1259 = vadd.f32 %v1214, %v1258
        %v1260 = vpop.f32.mrb[0].mxu0
        %v1261 = vpop.f32.mrb[0].mxu0
        %v1262 = vpop.f32.mrb[0].mxu0
        %1263 = vdwg.mxu0
        %1265 = vset.pattern.permute.xlu0 0
        %1266 = vperm.xlu0 %1265, %v567
        %v1267 = vpop.permute.xlu0 %1266
        %v1269 = vadd.f32 %v1259, %v1267
        %v1270 = vmax.f32 %v1269, 0.0
        %v1271 = vsel %vm612, %v1077, 0.0
        %v1272 = vrot.slane %v1271, 4
        %v1273 = vadd.f32 %v1271, %v1272
        %v1274 = vrot.slane %v1273, 2
        %v1275 = vadd.f32 %v1273, %v1274
        %v1276 = vrot.slane %v1275, 1
        %v1277 = vadd.f32 %v1275, %v1276
        %v1278 = vmul.f32 %v1277, %v864
        %1280 = vset.pattern.permute.xlu0 0
        %1281 = vperm.xlu0 %1280, %v569
        %v1282 = vpop.permute.xlu0 %1281
        %v1284 = vlaneseq
        %v1285 = vshrl.u32 %v1284, 7
        %v1286 = vsub.s32 0, %v1285
        %v1287 = vrot.slane %v1282, %v1286
        %v1288 = vmul.f32 %v1287, %v1278
        %v1290 = vsel %vm757, %v568, 0
        %1292 = vmatprep.subr.mxu0 0.0
        %1293 = vmatpush1.msra.mxu0 %v1270
        %1294 = vmatprep.subr.mxu0 0.0
        %1295 = vmatpush1.msra.mxu0 0.0
        %1296 = vmatprep.subr.mxu0 0.0
        %1297 = vmatpush1.msra.mxu0 0.0
        %1298 = vmatprep.subr.mxu0 0.0
        %1299 = vmatpush1.msra.mxu0 0.0
        %1300 = vmatprep.subr.mxu0 0.0
        %1301 = vmatpush1.msra.mxu0 0.0
        %1302 = vmatprep.subr.mxu0 0.0
        %1303 = vmatpush1.msra.mxu0 0.0
        %1304 = vmatprep.subr.mxu0 0.0
        %1305 = vmatpush1.msra.mxu0 0.0
        %1306 = vmatprep.subr.mxu0 0.0
        %1307 = vmatpush1.msra.mxu0 0.0
        %1308 = vmatprep.subr.mxu0 0.0
        %1309 = vmatpush1.msra.mxu0 0.0
        %1310 = vmatprep.subr.mxu0 0.0
        %1311 = vmatpush1.msra.mxu0 0.0
        %1312 = vmatprep.subr.mxu0 0.0
        %1313 = vmatpush1.msra.mxu0 0.0
        %1314 = vmatprep.subr.mxu0 0.0
        %1315 = vmatpush1.msra.mxu0 0.0
        %1316 = vmatprep.subr.mxu0 0.0
        %1317 = vmatpush1.msra.mxu0 0.0
        %1318 = vmatprep.subr.mxu0 0.0
        %1319 = vmatpush1.msra.mxu0 0.0
        %1320 = vmatprep.subr.mxu0 0.0
        %1321 = vmatpush1.msra.mxu0 0.0
        %1322 = vmatprep.subr.mxu0 0.0
        %1323 = vmatpush1.msra.mxu0 0.0
        %1324 = vmatprep.subr.mxu0 0.0
        %1325 = vmatpush1.msra.mxu0 0.0
        %1326 = vmatprep.subr.mxu0 0.0
        %1327 = vmatpush1.msra.mxu0 0.0
        %1328 = vmatprep.subr.mxu0 0.0
        %1329 = vmatpush1.msra.mxu0 0.0
        %1330 = vmatprep.subr.mxu0 0.0
        %1331 = vmatpush1.msra.mxu0 0.0
        %1332 = vmatprep.subr.mxu0 0.0
        %1333 = vmatpush1.msra.mxu0 0.0
        %1334 = vmatprep.subr.mxu0 0.0
        %1335 = vmatpush1.msra.mxu0 0.0
        %1336 = vmatprep.subr.mxu0 0.0
        %1337 = vmatpush1.msra.mxu0 0.0
        %1338 = vmatprep.subr.mxu0 0.0
        %1339 = vmatpush1.msra.mxu0 0.0
        %1340 = vmatprep.subr.mxu0 0.0
        %1341 = vmatpush1.msra.mxu0 0.0
        %1342 = vmatprep.subr.mxu0 0.0
        %1343 = vmatpush1.msra.mxu0 0.0
        %1344 = vmatprep.subr.mxu0 0.0
        %1345 = vmatpush1.msra.mxu0 0.0
        %1346 = vmatprep.subr.mxu0 0.0
        %1347 = vmatpush1.msra.mxu0 0.0
        %1348 = vmatprep.subr.mxu0 0.0
        %1349 = vmatpush1.msra.mxu0 0.0
        %1350 = vmatprep.subr.mxu0 0.0
        %1351 = vmatpush1.msra.mxu0 0.0
        %1352 = vmatprep.subr.mxu0 0.0
        %1353 = vmatpush1.msra.mxu0 0.0
        %1354 = vmatprep.subr.mxu0 0.0
        %1355 = vmatpush1.msra.mxu0 0.0
        %1356 = vmatprep.mubr.f32.mxu0 0.0
        %1357 = vmatmul.mubr.f32.gmra.mrb[0].mxu0 %v1290
        %v1358 = vpop.f32.mrb[0].mxu0
        %v1359 = vadd.f32 0.0, %v1358
        %v1360 = vpop.f32.mrb[0].mxu0
        %1361 = vdwg.mxu0
        %v1362 = vadd.f32 %v1288, %v1359
        %1363 = vset.pattern.permute.xlu0 1
        %1364 = vperm.xlu0 %1363, %v569
        %v1365 = vpop.permute.xlu0 %1364
        %v1367 = vlaneseq
        %v1368 = vshrl.u32 %v1367, 7
        %v1369 = vsub.s32 0, %v1368
        %v1370 = vrot.slane %v1365, %v1369
        %v1371 = vadd.f32 %v1362, %v1370
        %v1372 = vmax.f32 %v1371, 0.0
        %v1374 = vlaneseq
        %v1375 = vshrl.u32 %v1374, 7
        %v1376 = vsub.s32 0, %v1375
        %v1377 = vrot.slane %v571, %v1376
        %1379 = vxpose.xlu0.b32.start [1/16] %v1372, 128
        %1380 = vxpose.xlu0.b32.cont [2/16] 0.0, 128
        %1381 = vxpose.xlu0.b32.cont [3/16] 0.0, 128
        %1382 = vxpose.xlu0.b32.cont [4/16] 0.0, 128
        %1383 = vxpose.xlu0.b32.cont [5/16] 0.0, 128
        %1384 = vxpose.xlu0.b32.cont [6/16] 0.0, 128
        %1385 = vxpose.xlu0.b32.cont [7/16] 0.0, 128
        %1386 = vxpose.xlu0.b32.cont [8/16] 0.0, 128
        %1387 = vxpose.xlu0.b32.cont [9/16] 0.0, 128
        %1388 = vxpose.xlu0.b32.cont [10/16] 0.0, 128
        %1389 = vxpose.xlu0.b32.cont [11/16] 0.0, 128
        %1390 = vxpose.xlu0.b32.cont [12/16] 0.0, 128
        %1391 = vxpose.xlu0.b32.cont [13/16] 0.0, 128
        %1392 = vxpose.xlu0.b32.cont [14/16] 0.0, 128
        %1393 = vxpose.xlu0.b32.cont [15/16] 0.0, 128
        %1394 = vxpose.xlu0.b32.end [16/16] 0.0, 128
        %v1395 = vpop.trf.xlu0
        %v1396 = vpop.trf.xlu0
        %v1397 = vpop.trf.xlu0
        %v1398 = vpop.trf.xlu0
        %v1399 = vpop.trf.xlu0
        %v1400 = vpop.trf.xlu0
        %v1401 = vpop.trf.xlu0
        %v1402 = vpop.trf.xlu0
        %v1403 = vpop.trf.xlu0
        %v1404 = vpop.trf.xlu0
        %v1405 = vpop.trf.xlu0
        %v1406 = vpop.trf.xlu0
        %v1407 = vpop.trf.xlu0
        %v1408 = vpop.trf.xlu0
        %v1409 = vpop.trf.xlu0
        %v1410 = vpop.trf.xlu0
        %vm1411 = vcmask 7168
        %v1413 = vsel %vm1411, %v1395, 0
        %v1416 = vsel %vm1411, %v1396, 0
        %v1419 = vsel %vm1411, %v1397, 0
        %v1422 = vsel %vm1411, %v1398, 0
        %v1425 = vsel %vm1411, %v1399, 0
        %v1428 = vsel %vm1411, %v1400, 0
        %v1431 = vsel %vm1411, %v1401, 0
        %v1434 = vsel %vm1411, %v1402, 0
        %v1437 = vsel %vm1411, %v570, 0
        %1439 = vmatprep.subr.mxu0 0.0
        %1440 = vmatpush1.xpose.msra.mxu0 %v1437
        %1441 = vmatprep.subr.mxu0 0.0
        %1442 = vmatpush1.xpose.msra.mxu0 0.0
        %1443 = vmatprep.subr.mxu0 0.0
        %1444 = vmatpush1.xpose.msra.mxu0 0.0
        %1445 = vmatprep.subr.mxu0 0.0
        %1446 = vmatpush1.xpose.msra.mxu0 0.0
        %1447 = vmatprep.subr.mxu0 0.0
        %1448 = vmatpush1.xpose.msra.mxu0 0.0
        %1449 = vmatprep.subr.mxu0 0.0
        %1450 = vmatpush1.xpose.msra.mxu0 0.0
        %1451 = vmatprep.subr.mxu0 0.0
        %1452 = vmatpush1.xpose.msra.mxu0 0.0
        %1453 = vmatprep.subr.mxu0 0.0
        %1454 = vmatpush1.xpose.msra.mxu0 0.0
        %1455 = vmatprep.subr.mxu0 0.0
        %1456 = vmatpush1.xpose.msra.mxu0 0.0
        %1457 = vmatprep.subr.mxu0 0.0
        %1458 = vmatpush1.xpose.msra.mxu0 0.0
        %1459 = vmatprep.subr.mxu0 0.0
        %1460 = vmatpush1.xpose.msra.mxu0 0.0
        %1461 = vmatprep.subr.mxu0 0.0
        %1462 = vmatpush1.xpose.msra.mxu0 0.0
        %1463 = vmatprep.subr.mxu0 0.0
        %1464 = vmatpush1.xpose.msra.mxu0 0.0
        %1465 = vmatprep.subr.mxu0 0.0
        %1466 = vmatpush1.xpose.msra.mxu0 0.0
        %1467 = vmatprep.subr.mxu0 0.0
        %1468 = vmatpush1.xpose.msra.mxu0 0.0
        %1469 = vmatprep.subr.mxu0 0.0
        %1470 = vmatpush1.xpose.msra.mxu0 0.0
        %1471 = vmatprep.subr.mxu0 0.0
        %1472 = vmatpush1.xpose.msra.mxu0 0.0
        %1473 = vmatprep.subr.mxu0 0.0
        %1474 = vmatpush1.xpose.msra.mxu0 0.0
        %1475 = vmatprep.subr.mxu0 0.0
        %1476 = vmatpush1.xpose.msra.mxu0 0.0
        %1477 = vmatprep.subr.mxu0 0.0
        %1478 = vmatpush1.xpose.msra.mxu0 0.0
        %1479 = vmatprep.subr.mxu0 0.0
        %1480 = vmatpush1.xpose.msra.mxu0 0.0
        %1481 = vmatprep.subr.mxu0 0.0
        %1482 = vmatpush1.xpose.msra.mxu0 0.0
        %1483 = vmatprep.subr.mxu0 0.0
        %1484 = vmatpush1.xpose.msra.mxu0 0.0
        %1485 = vmatprep.subr.mxu0 0.0
        %1486 = vmatpush1.xpose.msra.mxu0 0.0
        %1487 = vmatprep.subr.mxu0 0.0
        %1488 = vmatpush1.xpose.msra.mxu0 0.0
        %1489 = vmatprep.subr.mxu0 0.0
        %1490 = vmatpush1.xpose.msra.mxu0 0.0
        %1491 = vmatprep.subr.mxu0 0.0
        %1492 = vmatpush1.xpose.msra.mxu0 0.0
        %1493 = vmatprep.subr.mxu0 0.0
        %1494 = vmatpush1.xpose.msra.mxu0 0.0
        %1495 = vmatprep.subr.mxu0 0.0
        %1496 = vmatpush1.xpose.msra.mxu0 0.0
        %1497 = vmatprep.subr.mxu0 0.0
        %1498 = vmatpush1.xpose.msra.mxu0 0.0
        %1499 = vmatprep.subr.mxu0 0.0
        %1500 = vmatpush1.xpose.msra.mxu0 0.0
        %1501 = vmatprep.subr.mxu0 0.0
        %1502 = vmatpush1.xpose.msra.mxu0 0.0
        %1503 = vmatprep.mubr.f32.mxu0 0.0
        %1504 = vmatmul.mubr.f32.gmra.mrb[0].mxu0 %v1413
        %v1505 = vpop.f32.mrb[0].mxu0
        %v1506 = vadd.f32 %v1377, %v1505
        %v1507 = vpop.f32.mrb[0].mxu0
        %1508 = vmatprep.mubr.f32.mxu0 0.0
        %1509 = vmatmul.mubr.f32.gmra.mrb[0].mxu0 %v1416
        %v1510 = vpop.f32.mrb[0].mxu0
        %v1511 = vadd.f32 %v1377, %v1510
        %v1512 = vpop.f32.mrb[0].mxu0
        %1513 = vmatprep.mubr.f32.mxu0 0.0
        %1514 = vmatmul.mubr.f32.gmra.mrb[0].mxu0 %v1419
        %v1515 = vpop.f32.mrb[0].mxu0
        %v1516 = vadd.f32 %v1377, %v1515
        %v1517 = vpop.f32.mrb[0].mxu0
        %1518 = vmatprep.mubr.f32.mxu0 0.0
        %1519 = vmatmul.mubr.f32.gmra.mrb[0].mxu0 %v1422
        %v1520 = vpop.f32.mrb[0].mxu0
        %v1521 = vadd.f32 %v1377, %v1520
        %v1522 = vpop.f32.mrb[0].mxu0
        %1523 = vmatprep.mubr.f32.mxu0 0.0
        %1524 = vmatmul.mubr.f32.gmra.mrb[0].mxu0 %v1425
        %v1525 = vpop.f32.mrb[0].mxu0
        %v1526 = vadd.f32 %v1377, %v1525
        %v1527 = vpop.f32.mrb[0].mxu0
        %1528 = vmatprep.mubr.f32.mxu0 0.0
        %1529 = vmatmul.mubr.f32.gmra.mrb[0].mxu0 %v1428
        %v1530 = vpop.f32.mrb[0].mxu0
        %v1531 = vadd.f32 %v1377, %v1530
        %v1532 = vpop.f32.mrb[0].mxu0
        %1533 = vmatprep.mubr.f32.mxu0 0.0
        %1534 = vmatmul.mubr.f32.gmra.mrb[0].mxu0 %v1431
        %v1535 = vpop.f32.mrb[0].mxu0
        %v1536 = vadd.f32 %v1377, %v1535
        %v1537 = vpop.f32.mrb[0].mxu0
        %1538 = vmatprep.mubr.f32.mxu0 0.0
        %1539 = vmatmul.mubr.f32.gmra.mrb[0].mxu0 %v1434
        %v1540 = vpop.f32.mrb[0].mxu0
        %v1541 = vadd.f32 %v1377, %v1540
        %v1542 = vpop.f32.mrb[0].mxu0
        %1543 = vdwg.mxu0
        %v1544 = vxor.u32 %v1506, 2147483648
        %v1545 = vxor.u32 %v1511, 2147483648
        %v1546 = vxor.u32 %v1516, 2147483648
        %v1547 = vxor.u32 %v1521, 2147483648
        %v1548 = vxor.u32 %v1526, 2147483648
        %v1549 = vxor.u32 %v1531, 2147483648
        %v1550 = vxor.u32 %v1536, 2147483648
        %v1551 = vxor.u32 %v1541, 2147483648
        %v1552 = vmul.f32 %v1544, 1.442695
        %v1553 = vpow.pop %v1552
        %v1554 = vmul.f32 %v1545, 1.442695
        %v1555 = vpow.pop %v1554
        %v1556 = vmul.f32 %v1546, 1.442695
        %v1557 = vpow.pop %v1556
        %v1558 = vmul.f32 %v1547, 1.442695
        %v1559 = vpow.pop %v1558
        %v1560 = vmul.f32 %v1548, 1.442695
        %v1561 = vpow.pop %v1560
        %v1562 = vmul.f32 %v1549, 1.442695
        %v1563 = vpow.pop %v1562
        %v1564 = vmul.f32 %v1550, 1.442695
        %v1565 = vpow.pop %v1564
        %v1566 = vmul.f32 %v1551, 1.442695
        %v1567 = vpow.pop %v1566
        %v1568 = vadd.f32 %v1553, 1.0
        %v1569 = vadd.f32 %v1555, 1.0
        %v1570 = vadd.f32 %v1557, 1.0
        %v1571 = vadd.f32 %v1559, 1.0
        %v1572 = vadd.f32 %v1561, 1.0
        %v1573 = vadd.f32 %v1563, 1.0
        %v1574 = vadd.f32 %v1565, 1.0
        %v1575 = vadd.f32 %v1567, 1.0
        %v1576 = vrcp.pop %v1568
        %v1577 = vmul.f32 1.0, %v1576
        %v1578 = vrcp.pop %v1569
        %v1579 = vmul.f32 1.0, %v1578
        %v1580 = vrcp.pop %v1570
        %v1581 = vmul.f32 1.0, %v1580
        %v1582 = vrcp.pop %v1571
        %v1583 = vmul.f32 1.0, %v1582
        %v1584 = vrcp.pop %v1572
        %v1585 = vmul.f32 1.0, %v1584
        %v1586 = vrcp.pop %v1573
        %v1587 = vmul.f32 1.0, %v1586
        %v1588 = vrcp.pop %v1574
        %v1589 = vmul.f32 1.0, %v1588
        %v1590 = vrcp.pop %v1575
        %v1591 = vmul.f32 1.0, %v1590
        %1593 = vset.pattern.permute.xlu0 0
        %1594 = vperm.xlu0 %1593, %v1577
        %v1595 = vpop.permute.xlu0 %1594
        %1598 = vset.pattern.permute.xlu0 0
        %1599 = vperm.xlu0 %1598, %v1579
        %v1600 = vpop.permute.xlu0 %1599
        %1603 = vset.pattern.permute.xlu0 0
        %1604 = vperm.xlu0 %1603, %v1581
        %v1605 = vpop.permute.xlu0 %1604
        %1608 = vset.pattern.permute.xlu0 0
        %1609 = vperm.xlu0 %1608, %v1583
        %v1610 = vpop.permute.xlu0 %1609
        %1613 = vset.pattern.permute.xlu0 0
        %1614 = vperm.xlu0 %1613, %v1585
        %v1615 = vpop.permute.xlu0 %1614
        %1618 = vset.pattern.permute.xlu0 0
        %1619 = vperm.xlu0 %1618, %v1587
        %v1620 = vpop.permute.xlu0 %1619
        %1623 = vset.pattern.permute.xlu0 0
        %1624 = vperm.xlu0 %1623, %v1589
        %v1625 = vpop.permute.xlu0 %1624
        %1628 = vset.pattern.permute.xlu0 0
        %1629 = vperm.xlu0 %1628, %v1591
        %v1630 = vpop.permute.xlu0 %1629
        %v1632 = vmul.f32 %v1595, %v990
        %v1633 = vmul.f32 %v1600, %v991
        %v1634 = vmul.f32 %v1605, %v992
        %v1635 = vmul.f32 %v1610, %v993
        %v1636 = vmul.f32 %v1615, %v994
        %v1637 = vmul.f32 %v1620, %v995
        %v1638 = vmul.f32 %v1625, %v996
        %v1639 = vmul.f32 %v1630, %v997
        %1640 = vst [vmem:[%s545] sm:$0xff] %v1632
        %1641 = vst [vmem:[%s545 + $0x8] sm:$0xff] %v1633
        %1642 = vst [vmem:[%s545 + $0x10] sm:$0xff] %v1634
        %1643 = vst [vmem:[%s545 + $0x18] sm:$0xff] %v1635
        %1644 = vst [vmem:[%s545 + $0x20] sm:$0xff] %v1636
        %1645 = vst [vmem:[%s545 + $0x28] sm:$0xff] %v1637
        %1646 = vst [vmem:[%s545 + $0x30] sm:$0xff] %v1638
        %1647 = vst [vmem:[%s545 + $0x38] sm:$0xff] %v1639
        %s1648 = sand.u32 %s388, 1
        %s1649 = scalar_lea.sflag [#allocation7], %s1648
        %s1650 = sand.u32 %s388, 1
        %s1651 = smul.addr %s1650, 64
        %s1652 = scalar_lea.vmem [#allocation8], %s1651
        // Predicated region
        $region89: #{tpu_custom_call.1} parent=83 // pred_check
          %p1653 = pneg %p398
        $region90: #{tpu_custom_call.1} parent=83 // pred_check_branch
          %1655 = sbr.rel (%p1653) target = $region92
        $region91: #{tpu_custom_call.1} parent=83 // pred_region
          %s1657 = ssub.s32 1024, 1024
          %1658 = vsyncadd %s1649, %s1657
          %s1659 = smul.addr %s39, 8
          %s1660 = smul.addr %s1659, 128
          %s1661 = scalar_lea.hbm %s16, %s1660
          %s1662 = sshll.u32 %s1652, 4
          %s1663 = int_to_ptr.vmem [resolvable:$true] %s1662
          %1668 = dma.vmem_to_hbm [thread:$0]  %s1663, 1024, %s1661, %s1649, 128, 128, 8
        $region92: #{tpu_custom_call.1} parent=83 // pred_fallthru
          _
      $region84: #{tpu_custom_call.1} parent=5 // pred_fallthru
        _
      %p1669 = scmp.le.s32.totalorder 2, %s34
      // Predicated region
      $region93: #{tpu_custom_call.1} parent=5 // pred_check
        %p1670 = pneg %p1669
      $region94: #{tpu_custom_call.1} parent=5 // pred_check_branch
        %1672 = sbr.rel (%p1670) target = $region96
      $region95: #{tpu_custom_call.1} parent=5 // pred_region
        %s1673 = ssub.s32 %s34, 2
        // Predicated region
        $region97: #{tpu_custom_call.1} parent=95 // pred_check
          %p1674 = pneg %p404
        $region98: #{tpu_custom_call.1} parent=95 // pred_check_branch
          %1676 = sbr.rel (%p1674) target = $region100
        $region99: #{tpu_custom_call.1} parent=95 // pred_region
          %s1677 = sand.u32 %s389, 1
          %s1678 = scalar_lea.sflag [#allocation7], %s1677
          %s1679 = sand.u32 %s389, 1
          %s1680 = smul.addr %s1679, 64
          %s1681 = scalar_lea.vmem [#allocation8], %s1680
          %1682 = dma.done %s1678, 1024
        $region100: #{tpu_custom_call.1} parent=95 // pred_fallthru
          _
      $region96: #{tpu_custom_call.1} parent=5 // pred_fallthru
        _
    $region6: #{tpu_custom_call.1} parent=1 // loop_footer
      %s38 = sadd.s32 1, %s34
    $region7: #{tpu_custom_call.1} parent=1 // loop_footer_branch
      %33 = sbr.rel target = $region3
    $region8: #{tpu_custom_call.1} parent=1 // loop_exit
      _
    %1683 = vsyncpa [#allocation6], 1
    %s1684 = scalar_lea.sflag [#allocation6], 1
    %1685 = vsyncpa %s1684, 1
    %1686 = vsyncpa [#allocation7], 1
    %s1687 = scalar_lea.sflag [#allocation7], 1
    %1688 = vsyncpa %s1687, 1

</llo_original>
